<compile_context>
chip_gen: v7x
topology: tpu7x:2x2x1
jax: 0.10.0
libtpu: 0.0.40
codegen_flags: <defaults>
</compile_context>

<pallas_src>
import jax
import jax.numpy as jnp
import numpy as np
from jax.experimental import pallas as pl
from jax.experimental.pallas import tpu as pltpu

EPS = 1e-10


# --------------------------------------------------------------------------------------
# Pallas kernel: the whole post-embedding compute graph of ItemModel.forward
# --------------------------------------------------------------------------------------
def item_model_kernel(
    p_ref, q_ref, uid_ref, rid_ref, kid_ref, sid_ref,                 # activations / ids
    rat_tbl_ref, rank_tbl_ref, spec_tbl_ref,                          # tiny VMEM-resident tables
    gu_w1a_ref, gu_w1b_ref, gu_b1_ref, gu_w2_ref, gu_b2_ref,          # g_u : Linear(2D,D), ReLU, Linear(D,D)
    at_w1a_ref, at_w1b_ref, at_b1_ref, at_w2_ref, at_b2_ref,          # item_users_attn : Linear(2D,D), ReLU, Linear(D,1)
    ag_w_ref, ag_b_ref,                                               # aggr_users : Linear(D,D), ReLU
    m_w1a_ref, m_w1b_ref, m_b1_ref, m_w2_ref, m_b2_ref, m_w3_ref, m_b3_ref,  # final 3-layer MLP
    out_ref,
):
    N, D = p_ref.shape
    B, S = uid_ref.shape
    f32, bf16 = jnp.float32, jnp.bfloat16

    # ---- exact in-kernel gather via one-hot matmul (tables are KB-scale, VMEM resident) --
    def onehot_gather(ids_ref, tbl_ref):
        ids = ids_ref[...]                                            # (N, 1) int32
        tbl = tbl_ref[...]                                            # (n_pad, D) bf16
        n = tbl.shape[0]
        iota = jax.lax.broadcasted_iota(jnp.int32, (N, n), 1)
        oh = jnp.where(ids == iota, 1.0, 0.0).astype(bf16)            # (N, n) exact one-hot
        return jnp.dot(oh, tbl, preferred_element_type=f32)           # (N, D) f32, exact gather

    er = onehot_gather(rid_ref, rat_tbl_ref)                          # rating emb  (N, D) f32
    nk = onehot_gather(kid_ref, rank_tbl_ref)                         # ranking emb (N, D) f32
    sp = onehot_gather(sid_ref, spec_tbl_ref).astype(bf16)            # species emb (N, D) bf16
    er_b = er.astype(bf16)                                            # lossless (values are bf16 table rows)

    p = p_ref[...]                                                    # (N, D) bf16
    gu_w1b, gu_w2 = gu_w1b_ref[...], gu_w2_ref[...]
    gu_b1, gu_b2 = gu_b1_ref[...], gu_b2_ref[...]

    # g_u first-layer projection of p: computed once, reused by all three g_u calls.
    p_gu = jnp.dot(p, gu_w1a_ref[...], preferred_element_type=f32)    # (N, D) f32

    def g_u(x_b):
        # g_u([p, x]) with the p-half hoisted; x_b is the bf16 second input.
        h = jnp.maximum(p_gu + jnp.dot(x_b, gu_w1b, preferred_element_type=f32) + gu_b1, 0.0)
        return jnp.dot(h.astype(bf16), gu_w2, preferred_element_type=f32) + gu_b2

    # Branch 1: g_u([p, species]) * rating_emb
    f1 = g_u(sp) * er                                                 # (N, D) f32
    # Branch 2: g_u([p, g_u([p, rating_emb]) * ranking_emb])
    t = g_u(er_b) * nk
    f2 = g_u(t.astype(bf16))                                          # (N, D) f32

    # ---- attention over neighbors + masked normalization + aggregator ----
    mask = (uid_ref[...] > 0).astype(f32)                             # (B, S)
    at_w1a, at_b1 = at_w1a_ref[...], at_b1_ref[...]
    at_w2, at_b2 = at_w2_ref[...], at_b2_ref[...]
    ag_w, ag_b = ag_w_ref[...], ag_b_ref[...]
    # Item-query contribution: one (B,D) matmul, broadcast over neighbors (no (N,D) q copy).
    q_proj = jnp.dot(q_ref[...], at_w1b_ref[...], preferred_element_type=f32)   # (B, D)

    def attend_and_aggregate(f):
        h = jnp.dot(f.astype(bf16), at_w1a, preferred_element_type=f32) + at_b1
        h = jnp.maximum(h.reshape(B, S, D) + q_proj[:, None, :], 0.0)            # (B, S, D)
        # at_w2 stored (1, D) (PyTorch Linear(D,1).weight layout): h @ w.T == sum(h*w, -1)
        logits = jnp.sum(h * at_w2, axis=-1) + at_b2                              # (B, S)
        # Masked, shift-invariant exp-normalization.  Max over VALID logits only (clamped
        # at 0); masked slots become exp(-1e30)=0, so no 0*inf NaN and fully-masked rows
        # reduce to 0/(0+EPS)=0 exactly like the reference.
        ml = jnp.where(mask > 0, logits, -1e30)
        m = jnp.maximum(jnp.max(ml, axis=-1, keepdims=True), 0.0)                 # (B, 1)
        mu = jnp.exp(ml - m)                                                      # (B, S)
        denom = jnp.sum(mu, axis=-1, keepdims=True) + EPS * jnp.exp(-m)
        mu = mu * pl.reciprocal(denom, approx=True)                               # EUP divide
        # Attention-weighted sum over neighbors (S tiny -> VPU reduce is fine).
        agg = jnp.sum(mu[:, :, None] * f.reshape(B, S, D), axis=1)                # (B, D)
        return jnp.maximum(
            jnp.dot(agg.astype(bf16), ag_w, preferred_element_type=f32) + ag_b, 0.0)

    z1 = attend_and_aggregate(f1)                                     # (B, D)
    z2 = attend_and_aggregate(f2)                                     # (B, D)

    # ---- final fusion MLP: Linear(2D,D)+ReLU, Linear(D,D)+ReLU, Linear(D,D)+ReLU ----
    h = jnp.maximum(
        jnp.dot(z1.astype(bf16), m_w1a_ref[...], preferred_element_type=f32)
        + jnp.dot(z2.astype(bf16), m_w1b_ref[...], preferred_element_type=f32)
        + m_b1_ref[...], 0.0)
    h = jnp.maximum(
        jnp.dot(h.astype(bf16), m_w2_ref[...], preferred_element_type=f32) + m_b2_ref[...], 0.0)
    out_ref[...] = jnp.maximum(
        jnp.dot(h.astype(bf16), m_w3_ref[...], preferred_element_type=f32) + m_b3_ref[...], 0.0)


# --------------------------------------------------------------------------------------
# Parameter init (deterministic, synthetic), bf16 quantization, and wrapper
# --------------------------------------------------------------------------------------
def init_params(key, emb_dim, n_users, n_items, n_ratings, n_rankings, n_species):
    D = emb_dim
    ks = jax.random.split(key, 24)

    def tbl(k, n):
        return jax.random.normal(k, (n, D), jnp.float32) * 0.5

    def w(k, i, o):
        return jax.random.normal(k, (i, o), jnp.float32) * 0.1

    def b(k, o):
        return jax.random.normal(k, (1, o), jnp.float32) * 0.01

    return dict(
        user=tbl(ks[0], n_users), item=tbl(ks[1], n_items),
        rating=tbl(ks[2], n_ratings), ranking=tbl(ks[3], n_rankings),
        species=tbl(ks[4], n_species),
        gu_w1=w(ks[5], 2 * D, D), gu_b1=b(ks[6], D),
        gu_w2=w(ks[7], D, D), gu_b2=b(ks[8], D),
        at_w1=w(ks[9], 2 * D, D), at_b1=b(ks[10], D),
        at_w2=w(ks[11], 1, D), at_b2=b(ks[12], 1),
        ag_w=w(ks[13], D, D), ag_b=b(ks[14], D),
        m_w1=w(ks[15], 2 * D, D), m_b1=b(ks[16], D),
        m_w2=w(ks[17], D, D), m_b2=b(ks[18], D),
        m_w3=w(ks[19], D, D), m_b3=b(ks[20], D),
    )


def quantize_params(params):
    """Store embedding tables and weight matrices in bf16; keep biases in f32."""
    return {k: (v if "_b" in k else v.astype(jnp.bfloat16)) for k, v in params.items()}


def _nbytes(a):
    return int(a.size) * jnp.dtype(a.dtype).itemsize


def item_model_forward(params, iids, i_user_pad, i_userk_pad, i_user_species_pad,
                       *, batch_blocks=1):
    """batch_blocks shards the batch across grid steps (dimension_semantics='parallel').
    On v7x use >= 2 blocks sized so Nb = Bb*S is ~512-2048 and the per-block live set fits
    ~48 MiB; on v5e/v6e a single block is fine at small/medium batch."""
    B, S, _ = i_user_pad.shape
    D = params["user"].shape[1]
    assert B % batch_blocks == 0
    Bb = B // batch_blocks
    Nb = Bb * S
    N = B * S
    if batch_blocks > 1:
        assert Nb % 8 == 0, "per-block row count must be sublane-aligned"

    bf16, f32 = jnp.bfloat16, jnp.float32

    # Large-table gathers stay in XLA but travel as bf16 (half the HBM bytes).
    p_t = params["user"].astype(bf16)[i_user_pad[:, :, 0]].reshape(N, D)   # (N, D)
    q = params["item"].astype(bf16)[iids]                                   # (B, D)

    # Tiny-table gathers move in-kernel: ship the int32 ids + padded bf16 tables instead
    # of three (N, D) gathered activation streams.
    uid = i_user_pad[:, :, 0].astype(jnp.int32)                             # (B, S) -> mask
    rid = i_user_pad[:, :, 1].astype(jnp.int32).reshape(N, 1)
    kid = i_userk_pad[:, :, 1].astype(jnp.int32).reshape(N, 1)
    sid = i_user_species_pad[:, :, 1].astype(jnp.int32).reshape(N, 1)

    def pad_tbl(t):
        n = t.shape[0]
        n_pad = -(-n // 8) * 8
        if n_pad != n:
            t = jnp.pad(t, ((0, n_pad - n), (0, 0)))
        return t.astype(bf16)

    rat_tbl = pad_tbl(params["rating"])
    rank_tbl = pad_tbl(params["ranking"])
    spec_tbl = pad_tbl(params["species"])

    # Split the concat-consuming weights once in XLA (free) so the kernel never concats.
    def wsplit(w):
        return w[:D].astype(bf16), w[D:].astype(bf16)

    gu_w1a, gu_w1b = wsplit(params["gu_w1"])
    at_w1a, at_w1b = wsplit(params["at_w1"])
    m_w1a, m_w1b = wsplit(params["m_w1"])

    def wq(k):
        return params[k].astype(bf16)

    def bq(k):
        return params[k].astype(f32)

    args = (
        p_t, q, uid, rid, kid, sid,
        rat_tbl, rank_tbl, spec_tbl,
        gu_w1a, gu_w1b, bq("gu_b1"), wq("gu_w2"), bq("gu_b2"),
        at_w1a, at_w1b, bq("at_b1"), wq("at_w2"), bq("at_b2"),
        wq("ag_w"), bq("ag_b"),
        m_w1a, m_w1b, bq("m_b1"), wq("m_w2"), bq("m_b2"), wq("m_w3"), bq("m_b3"),
    )
    n_blocked = 6

    def blk(shape):                      # per-batch-block tiles
        return pl.BlockSpec(shape, lambda i: (i, 0))

    def full(a):                         # weights / tables / biases: same block every step
        nd = a.ndim
        return pl.BlockSpec(a.shape, lambda i, _nd=nd: (0,) * _nd)

    in_specs = (
        [blk((Nb, D)), blk((Bb, D)), blk((Bb, S)), blk((Nb, 1)), blk((Nb, 1)), blk((Nb, 1))]
        + [full(a) for a in args[n_blocked:]]
    )
    out_spec = pl.BlockSpec((Bb, D), lambda i: (i, 0))

    # Explicit scoped-VMEM limit: double-buffered blocked inputs + resident weights/tables
    # + output + generous allowance for in-body temporaries, clamped to the v7x budget.
    blocked_bytes = sum(2 * _nbytes(a) // batch_blocks for a in args[:n_blocked])
    resident_bytes = sum(_nbytes(a) for a in args[n_blocked:])
    out_bytes = 2 * (B * D * 4) // batch_blocks
    interm_bytes = 24 * Nb * D * 4
    vmem_limit = int(min(64 * 2 ** 20,
                         max(32 * 2 ** 20,
                             2 * (blocked_bytes + resident_bytes + out_bytes + interm_bytes))))

    return pl.pallas_call(
        item_model_kernel,
        out_shape=jax.ShapeDtypeStruct((B, D), jnp.float32),
        grid=(batch_blocks,),
        in_specs=in_specs,
        out_specs=out_spec,
        compiler_params=pltpu.CompilerParams(
            dimension_semantics=("parallel",),
            vmem_limit_bytes=vmem_limit),
    )(*args)


# --------------------------------------------------------------------------------------
# Pure-JAX reference for validation (mirrors the PyTorch forward exactly, f32 compute)
# --------------------------------------------------------------------------------------
def item_model_ref(params, iids, i_user_pad, i_userk_pad, i_user_species_pad):
    params = {k: v.astype(jnp.float32) for k, v in params.items()}
    p_t = params["user"][i_user_pad[:, :, 0]]
    er = params["rating"][i_user_pad[:, :, 1]]
    sp = params["species"][i_user_species_pad[:, :, 1]]
    nk = params["ranking"][i_userk_pad[:, :, 1]]
    q = params["item"][iids]
    mask = (i_user_pad[:, :, 0] > 0).astype(jnp.float32)

    def g_u(x):
        h = jnp.maximum(x @ params["gu_w1"] + params["gu_b1"], 0.0)
        return h @ params["gu_w2"] + params["gu_b2"]

    def attn(x):
        h = jnp.maximum(x @ params["at_w1"] + params["at_b1"], 0.0)
        return jnp.sum(h * params["at_w2"], axis=-1) + params["at_b2"][0, 0]

    def branch(f):
        q_e = jnp.broadcast_to(q[:, None, :], f.shape)
        mu = jnp.exp(attn(jnp.concatenate([f, q_e], axis=-1))) * mask
        mu = mu / (jnp.sum(mu, axis=1, keepdims=True) + EPS)
        agg = jnp.sum(mu[:, :, None] * f, axis=1)
        return jnp.maximum(agg @ params["ag_w"] + params["ag_b"], 0.0)

    f1 = g_u(jnp.concatenate([p_t, sp], axis=-1)) * er
    z1 = branch(f1)
    f2 = g_u(jnp.concatenate([p_t, er], axis=-1)) * nk
    f2 = g_u(jnp.concatenate([p_t, f2], axis=-1))
    z2 = branch(f2)

    z = jnp.concatenate([z1, z2], axis=-1)
    h = jnp.maximum(z @ params["m_w1"] + params["m_b1"], 0.0)
    h = jnp.maximum(h @ params["m_w2"] + params["m_b2"], 0.0)
    return jnp.maximum(h @ params["m_w3"] + params["m_b3"], 0.0)


if __name__ == "__main__":
    B, S, D = 2, 8, 32
    n_users, n_items, n_ratings, n_rankings, n_species = 20, 10, 6, 6, 5

    key = jax.random.PRNGKey(0)
    kp, k1, k2, k3, k4, k5 = jax.random.split(key, 6)
    params = quantize_params(
        init_params(kp, D, n_users, n_items, n_ratings, n_rankings, n_species))

    iids = jax.random.randint(k1, (B,), 0, n_items)
    uid = jax.random.randint(k2, (B, S), 1, n_users)
    # zero-pad the tail of each neighbor list (id 0 == padding, masked out)
    valid_len = jnp.array([6, 4])
    uid = uid * (jnp.arange(S)[None, :] < valid_len[:, None]).astype(uid.dtype)
    rating_ids = jax.random.randint(k3, (B, S), 0, n_ratings)
    ranking_ids = jax.random.randint(k4, (B, S), 0, n_rankings)
    species_ids = jax.random.randint(k5, (B, S), 0, n_species)

    i_user_pad = jnp.stack([uid, rating_ids], axis=-1)           # (B, S, 2)
    i_userk_pad = jnp.stack([uid, ranking_ids], axis=-1)         # (B, S, 2)
    i_user_species_pad = jnp.stack([uid, species_ids], axis=-1)  # (B, S, 2)

    out = item_model_forward(params, iids, i_user_pad, i_userk_pad, i_user_species_pad)
    out = jax.block_until_ready(out)

    ref = jax.block_until_ready(
        item_model_ref(params, iids, i_user_pad, i_userk_pad, i_user_species_pad)
    )
    # Both paths see the same bf16-stored parameters; remaining deltas come from the
    # kernel's bf16 intermediate casts and the EUP approximate reciprocal.
    np.testing.assert_allclose(np.asarray(out), np.asarray(ref), rtol=2e-2, atol=2e-2)

    print("KERNEL_OK")
</pallas_src>

<mosaic_0001>
module attributes {stable_mosaic.version = 11 : i64} {
  func.func @item_model_kernel(%arg0: i32, %arg1: memref<16x32xbf16, #tpu.memory_space<vmem>>, %arg2: memref<2x32xbf16, #tpu.memory_space<vmem>>, %arg3: memref<2x8xi32, #tpu.memory_space<vmem>>, %arg4: memref<16x1xi32, #tpu.memory_space<vmem>>, %arg5: memref<16x1xi32, #tpu.memory_space<vmem>>, %arg6: memref<16x1xi32, #tpu.memory_space<vmem>>, %arg7: memref<8x32xbf16, #tpu.memory_space<vmem>>, %arg8: memref<8x32xbf16, #tpu.memory_space<vmem>>, %arg9: memref<8x32xbf16, #tpu.memory_space<vmem>>, %arg10: memref<32x32xbf16, #tpu.memory_space<vmem>>, %arg11: memref<32x32xbf16, #tpu.memory_space<vmem>>, %arg12: memref<1x32xf32, #tpu.memory_space<vmem>>, %arg13: memref<32x32xbf16, #tpu.memory_space<vmem>>, %arg14: memref<1x32xf32, #tpu.memory_space<vmem>>, %arg15: memref<32x32xbf16, #tpu.memory_space<vmem>>, %arg16: memref<32x32xbf16, #tpu.memory_space<vmem>>, %arg17: memref<1x32xf32, #tpu.memory_space<vmem>>, %arg18: memref<1x32xbf16, #tpu.memory_space<vmem>>, %arg19: memref<1x1xf32, #tpu.memory_space<vmem>>, %arg20: memref<32x32xbf16, #tpu.memory_space<vmem>>, %arg21: memref<1x32xf32, #tpu.memory_space<vmem>>, %arg22: memref<32x32xbf16, #tpu.memory_space<vmem>>, %arg23: memref<32x32xbf16, #tpu.memory_space<vmem>>, %arg24: memref<1x32xf32, #tpu.memory_space<vmem>>, %arg25: memref<32x32xbf16, #tpu.memory_space<vmem>>, %arg26: memref<1x32xf32, #tpu.memory_space<vmem>>, %arg27: memref<32x32xbf16, #tpu.memory_space<vmem>>, %arg28: memref<1x32xf32, #tpu.memory_space<vmem>>, %arg29: memref<2x32xf32, #tpu.memory_space<vmem>>) attributes {dimension_semantics = [#tpu.dimension_semantics<parallel>], iteration_bounds = array<i64: 1>, scalar_prefetch = 0 : i64, scratch_operands = 0 : i64, tpu.core_type = #tpu.core_type<tc>, window_params = [{transform_indices = @transform_0, window_bounds = array<i64: 16, 32>}, {transform_indices = @transform_1, window_bounds = array<i64: 2, 32>}, {transform_indices = @transform_2, window_bounds = array<i64: 2, 8>}, {transform_indices = @transform_3, window_bounds = array<i64: 16, 1>}, {transform_indices = @transform_4, window_bounds = array<i64: 16, 1>}, {transform_indices = @transform_5, window_bounds = array<i64: 16, 1>}, {pipeline_mode = #tpu.pipeline_mode<synchronous>, transform_indices = @transform_6, window_bounds = array<i64: 8, 32>}, {pipeline_mode = #tpu.pipeline_mode<synchronous>, transform_indices = @transform_7, window_bounds = array<i64: 8, 32>}, {pipeline_mode = #tpu.pipeline_mode<synchronous>, transform_indices = @transform_8, window_bounds = array<i64: 8, 32>}, {pipeline_mode = #tpu.pipeline_mode<synchronous>, transform_indices = @transform_9, window_bounds = array<i64: 32, 32>}, {pipeline_mode = #tpu.pipeline_mode<synchronous>, transform_indices = @transform_10, window_bounds = array<i64: 32, 32>}, {pipeline_mode = #tpu.pipeline_mode<synchronous>, transform_indices = @transform_11, window_bounds = array<i64: 1, 32>}, {pipeline_mode = #tpu.pipeline_mode<synchronous>, transform_indices = @transform_12, window_bounds = array<i64: 32, 32>}, {pipeline_mode = #tpu.pipeline_mode<synchronous>, transform_indices = @transform_13, window_bounds = array<i64: 1, 32>}, {pipeline_mode = #tpu.pipeline_mode<synchronous>, transform_indices = @transform_14, window_bounds = array<i64: 32, 32>}, {pipeline_mode = #tpu.pipeline_mode<synchronous>, transform_indices = @transform_15, window_bounds = array<i64: 32, 32>}, {pipeline_mode = #tpu.pipeline_mode<synchronous>, transform_indices = @transform_16, window_bounds = array<i64: 1, 32>}, {pipeline_mode = #tpu.pipeline_mode<synchronous>, transform_indices = @transform_17, window_bounds = array<i64: 1, 32>}, {pipeline_mode = #tpu.pipeline_mode<synchronous>, transform_indices = @transform_18, window_bounds = array<i64: 1, 1>}, {pipeline_mode = #tpu.pipeline_mode<synchronous>, transform_indices = @transform_19, window_bounds = array<i64: 32, 32>}, {pipeline_mode = #tpu.pipeline_mode<synchronous>, transform_indices = @transform_20, window_bounds = array<i64: 1, 32>}, {pipeline_mode = #tpu.pipeline_mode<synchronous>, transform_indices = @transform_21, window_bounds = array<i64: 32, 32>}, {pipeline_mode = #tpu.pipeline_mode<synchronous>, transform_indices = @transform_22, window_bounds = array<i64: 32, 32>}, {pipeline_mode = #tpu.pipeline_mode<synchronous>, transform_indices = @transform_23, window_bounds = array<i64: 1, 32>}, {pipeline_mode = #tpu.pipeline_mode<synchronous>, transform_indices = @transform_24, window_bounds = array<i64: 32, 32>}, {pipeline_mode = #tpu.pipeline_mode<synchronous>, transform_indices = @transform_25, window_bounds = array<i64: 1, 32>}, {pipeline_mode = #tpu.pipeline_mode<synchronous>, transform_indices = @transform_26, window_bounds = array<i64: 32, 32>}, {pipeline_mode = #tpu.pipeline_mode<synchronous>, transform_indices = @transform_27, window_bounds = array<i64: 1, 32>}, {transform_indices = @transform_28, window_bounds = array<i64: 2, 32>}]} {
    %c0 = arith.constant 0 : index
    %c0_0 = arith.constant 0 : index
    %0 = vector.load %arg4[%c0, %c0_0] : memref<16x1xi32, #tpu.memory_space<vmem>>, vector<16x1xi32>
    %c0_1 = arith.constant 0 : index
    %c0_2 = arith.constant 0 : index
    %1 = vector.load %arg7[%c0_1, %c0_2] : memref<8x32xbf16, #tpu.memory_space<vmem>>, vector<8x32xbf16>
    %2 = tpu.iota {dimensions = array<i32: 1>} : vector<16x8xi32>
    %3 = vector.broadcast %0 : vector<16x1xi32> to vector<16x8xi32>
    %4 = arith.cmpi eq, %3, %2 : vector<16x8xi32>
    %cst = arith.constant 1.000000e+00 : f32
    %cst_3 = arith.constant 0.000000e+00 : f32
    %5 = vector.broadcast %cst : f32 to vector<16x8xf32>
    %6 = vector.broadcast %cst_3 : f32 to vector<16x8xf32>
    %7 = arith.select %4, %5, %6 : vector<16x8xi1>, vector<16x8xf32>
    %8 = arith.truncf %7 : vector<16x8xf32> to vector<16x8xbf16>
    %cst_4 = arith.constant dense<0.000000e+00> : vector<16x32xf32>
    %9 = tpu.matmul %8, %1, %cst_4 {dimension_numbers = #tpu.dot_dimension_numbers<[1], [0], [0], [1], [0, 0, 1, 1], [], []>} : vector<16x8xbf16>, vector<8x32xbf16>, vector<16x32xf32> -> vector<16x32xf32>
    %c0_5 = arith.constant 0 : index
    %c0_6 = arith.constant 0 : index
    %10 = vector.load %arg5[%c0_5, %c0_6] : memref<16x1xi32, #tpu.memory_space<vmem>>, vector<16x1xi32>
    %c0_7 = arith.constant 0 : index
    %c0_8 = arith.constant 0 : index
    %11 = vector.load %arg8[%c0_7, %c0_8] : memref<8x32xbf16, #tpu.memory_space<vmem>>, vector<8x32xbf16>
    %12 = tpu.iota {dimensions = array<i32: 1>} : vector<16x8xi32>
    %13 = vector.broadcast %10 : vector<16x1xi32> to vector<16x8xi32>
    %14 = arith.cmpi eq, %13, %12 : vector<16x8xi32>
    %cst_9 = arith.constant 1.000000e+00 : f32
    %cst_10 = arith.constant 0.000000e+00 : f32
    %15 = vector.broadcast %cst_9 : f32 to vector<16x8xf32>
    %16 = vector.broadcast %cst_10 : f32 to vector<16x8xf32>
    %17 = arith.select %14, %15, %16 : vector<16x8xi1>, vector<16x8xf32>
    %18 = arith.truncf %17 : vector<16x8xf32> to vector<16x8xbf16>
    %cst_11 = arith.constant dense<0.000000e+00> : vector<16x32xf32>
    %19 = tpu.matmul %18, %11, %cst_11 {dimension_numbers = #tpu.dot_dimension_numbers<[1], [0], [0], [1], [0, 0, 1, 1], [], []>} : vector<16x8xbf16>, vector<8x32xbf16>, vector<16x32xf32> -> vector<16x32xf32>
    %c0_12 = arith.constant 0 : index
    %c0_13 = arith.constant 0 : index
    %20 = vector.load %arg6[%c0_12, %c0_13] : memref<16x1xi32, #tpu.memory_space<vmem>>, vector<16x1xi32>
    %c0_14 = arith.constant 0 : index
    %c0_15 = arith.constant 0 : index
    %21 = vector.load %arg9[%c0_14, %c0_15] : memref<8x32xbf16, #tpu.memory_space<vmem>>, vector<8x32xbf16>
    %22 = tpu.iota {dimensions = array<i32: 1>} : vector<16x8xi32>
    %23 = vector.broadcast %20 : vector<16x1xi32> to vector<16x8xi32>
    %24 = arith.cmpi eq, %23, %22 : vector<16x8xi32>
    %cst_16 = arith.constant 1.000000e+00 : f32
    %cst_17 = arith.constant 0.000000e+00 : f32
    %25 = vector.broadcast %cst_16 : f32 to vector<16x8xf32>
    %26 = vector.broadcast %cst_17 : f32 to vector<16x8xf32>
    %27 = arith.select %24, %25, %26 : vector<16x8xi1>, vector<16x8xf32>
    %28 = arith.truncf %27 : vector<16x8xf32> to vector<16x8xbf16>
    %cst_18 = arith.constant dense<0.000000e+00> : vector<16x32xf32>
    %29 = tpu.matmul %28, %21, %cst_18 {dimension_numbers = #tpu.dot_dimension_numbers<[1], [0], [0], [1], [0, 0, 1, 1], [], []>} : vector<16x8xbf16>, vector<8x32xbf16>, vector<16x32xf32> -> vector<16x32xf32>
    %30 = arith.truncf %29 : vector<16x32xf32> to vector<16x32xbf16>
    %31 = arith.truncf %9 : vector<16x32xf32> to vector<16x32xbf16>
    %c0_19 = arith.constant 0 : index
    %c0_20 = arith.constant 0 : index
    %32 = vector.load %arg1[%c0_19, %c0_20] : memref<16x32xbf16, #tpu.memory_space<vmem>>, vector<16x32xbf16>
    %c0_21 = arith.constant 0 : index
    %c0_22 = arith.constant 0 : index
    %33 = vector.load %arg11[%c0_21, %c0_22] : memref<32x32xbf16, #tpu.memory_space<vmem>>, vector<32x32xbf16>
    %c0_23 = arith.constant 0 : index
    %c0_24 = arith.constant 0 : index
    %34 = vector.load %arg13[%c0_23, %c0_24] : memref<32x32xbf16, #tpu.memory_space<vmem>>, vector<32x32xbf16>
    %c0_25 = arith.constant 0 : index
    %c0_26 = arith.constant 0 : index
    %35 = vector.load %arg12[%c0_25, %c0_26] : memref<1x32xf32, #tpu.memory_space<vmem>>, vector<1x32xf32>
    %c0_27 = arith.constant 0 : index
    %c0_28 = arith.constant 0 : index
    %36 = vector.load %arg14[%c0_27, %c0_28] : memref<1x32xf32, #tpu.memory_space<vmem>>, vector<1x32xf32>
    %c0_29 = arith.constant 0 : index
    %c0_30 = arith.constant 0 : index
    %37 = vector.load %arg10[%c0_29, %c0_30] : memref<32x32xbf16, #tpu.memory_space<vmem>>, vector<32x32xbf16>
    %cst_31 = arith.constant dense<0.000000e+00> : vector<16x32xf32>
    %38 = tpu.matmul %32, %37, %cst_31 {dimension_numbers = #tpu.dot_dimension_numbers<[1], [0], [0], [1], [0, 0, 1, 1], [], []>} : vector<16x32xbf16>, vector<32x32xbf16>, vector<16x32xf32> -> vector<16x32xf32>
    %cst_32 = arith.constant dense<0.000000e+00> : vector<16x32xf32>
    %39 = tpu.matmul %30, %33, %cst_32 {dimension_numbers = #tpu.dot_dimension_numbers<[1], [0], [0], [1], [0, 0, 1, 1], [], []>} : vector<16x32xbf16>, vector<32x32xbf16>, vector<16x32xf32> -> vector<16x32xf32>
    %40 = arith.addf %38, %39 : vector<16x32xf32>
    %41 = vector.broadcast %35 : vector<1x32xf32> to vector<16x32xf32>
    %42 = arith.addf %40, %41 : vector<16x32xf32>
    %cst_33 = arith.constant 0.000000e+00 : f32
    %43 = vector.broadcast %cst_33 : f32 to vector<16x32xf32>
    %44 = arith.maximumf %42, %43 : vector<16x32xf32>
    %45 = arith.truncf %44 : vector<16x32xf32> to vector<16x32xbf16>
    %cst_34 = arith.constant dense<0.000000e+00> : vector<16x32xf32>
    %46 = tpu.matmul %45, %34, %cst_34 {dimension_numbers = #tpu.dot_dimension_numbers<[1], [0], [0], [1], [0, 0, 1, 1], [], []>} : vector<16x32xbf16>, vector<32x32xbf16>, vector<16x32xf32> -> vector<16x32xf32>
    %47 = vector.broadcast %36 : vector<1x32xf32> to vector<16x32xf32>
    %48 = arith.addf %46, %47 : vector<16x32xf32>
    %49 = arith.mulf %48, %9 : vector<16x32xf32>
    %cst_35 = arith.constant dense<0.000000e+00> : vector<16x32xf32>
    %50 = tpu.matmul %31, %33, %cst_35 {dimension_numbers = #tpu.dot_dimension_numbers<[1], [0], [0], [1], [0, 0, 1, 1], [], []>} : vector<16x32xbf16>, vector<32x32xbf16>, vector<16x32xf32> -> vector<16x32xf32>
    %51 = arith.addf %38, %50 : vector<16x32xf32>
    %52 = vector.broadcast %35 : vector<1x32xf32> to vector<16x32xf32>
    %53 = arith.addf %51, %52 : vector<16x32xf32>
    %cst_36 = arith.constant 0.000000e+00 : f32
    %54 = vector.broadcast %cst_36 : f32 to vector<16x32xf32>
    %55 = arith.maximumf %53, %54 : vector<16x32xf32>
    %56 = arith.truncf %55 : vector<16x32xf32> to vector<16x32xbf16>
    %cst_37 = arith.constant dense<0.000000e+00> : vector<16x32xf32>
    %57 = tpu.matmul %56, %34, %cst_37 {dimension_numbers = #tpu.dot_dimension_numbers<[1], [0], [0], [1], [0, 0, 1, 1], [], []>} : vector<16x32xbf16>, vector<32x32xbf16>, vector<16x32xf32> -> vector<16x32xf32>
    %58 = vector.broadcast %36 : vector<1x32xf32> to vector<16x32xf32>
    %59 = arith.addf %57, %58 : vector<16x32xf32>
    %60 = arith.mulf %59, %19 : vector<16x32xf32>
    %61 = arith.truncf %60 : vector<16x32xf32> to vector<16x32xbf16>
    %cst_38 = arith.constant dense<0.000000e+00> : vector<16x32xf32>
    %62 = tpu.matmul %61, %33, %cst_38 {dimension_numbers = #tpu.dot_dimension_numbers<[1], [0], [0], [1], [0, 0, 1, 1], [], []>} : vector<16x32xbf16>, vector<32x32xbf16>, vector<16x32xf32> -> vector<16x32xf32>
    %63 = arith.addf %38, %62 : vector<16x32xf32>
    %64 = vector.broadcast %35 : vector<1x32xf32> to vector<16x32xf32>
    %65 = arith.addf %63, %64 : vector<16x32xf32>
    %cst_39 = arith.constant 0.000000e+00 : f32
    %66 = vector.broadcast %cst_39 : f32 to vector<16x32xf32>
    %67 = arith.maximumf %65, %66 : vector<16x32xf32>
    %68 = arith.truncf %67 : vector<16x32xf32> to vector<16x32xbf16>
    %cst_40 = arith.constant dense<0.000000e+00> : vector<16x32xf32>
    %69 = tpu.matmul %68, %34, %cst_40 {dimension_numbers = #tpu.dot_dimension_numbers<[1], [0], [0], [1], [0, 0, 1, 1], [], []>} : vector<16x32xbf16>, vector<32x32xbf16>, vector<16x32xf32> -> vector<16x32xf32>
    %70 = vector.broadcast %36 : vector<1x32xf32> to vector<16x32xf32>
    %71 = arith.addf %69, %70 : vector<16x32xf32>
    %c0_41 = arith.constant 0 : index
    %c0_42 = arith.constant 0 : index
    %72 = vector.load %arg3[%c0_41, %c0_42] : memref<2x8xi32, #tpu.memory_space<vmem>>, vector<2x8xi32>
    %c0_i32 = arith.constant 0 : i32
    %73 = vector.broadcast %c0_i32 : i32 to vector<2x8xi32>
    %74 = arith.cmpi sgt, %72, %73 : vector<2x8xi32>
    %75 = arith.extui %74 : vector<2x8xi1> to vector<2x8xi32>
    %76 = arith.sitofp %75 : vector<2x8xi32> to vector<2x8xf32>
    %c0_43 = arith.constant 0 : index
    %c0_44 = arith.constant 0 : index
    %77 = vector.load %arg15[%c0_43, %c0_44] : memref<32x32xbf16, #tpu.memory_space<vmem>>, vector<32x32xbf16>
    %c0_45 = arith.constant 0 : index
    %c0_46 = arith.constant 0 : index
    %78 = vector.load %arg17[%c0_45, %c0_46] : memref<1x32xf32, #tpu.memory_space<vmem>>, vector<1x32xf32>
    %c0_47 = arith.constant 0 : index
    %c0_48 = arith.constant 0 : index
    %79 = vector.load %arg18[%c0_47, %c0_48] : memref<1x32xbf16, #tpu.memory_space<vmem>>, vector<1x32xbf16>
    %c0_49 = arith.constant 0 : index
    %c0_50 = arith.constant 0 : index
    %80 = vector.load %arg19[%c0_49, %c0_50] : memref<1x1xf32, #tpu.memory_space<vmem>>, vector<1x1xf32>
    %c0_51 = arith.constant 0 : index
    %c0_52 = arith.constant 0 : index
    %81 = vector.load %arg20[%c0_51, %c0_52] : memref<32x32xbf16, #tpu.memory_space<vmem>>, vector<32x32xbf16>
    %c0_53 = arith.constant 0 : index
    %c0_54 = arith.constant 0 : index
    %82 = vector.load %arg21[%c0_53, %c0_54] : memref<1x32xf32, #tpu.memory_space<vmem>>, vector<1x32xf32>
    %c0_55 = arith.constant 0 : index
    %c0_56 = arith.constant 0 : index
    %83 = vector.load %arg2[%c0_55, %c0_56] : memref<2x32xbf16, #tpu.memory_space<vmem>>, vector<2x32xbf16>
    %c0_57 = arith.constant 0 : index
    %c0_58 = arith.constant 0 : index
    %84 = vector.load %arg16[%c0_57, %c0_58] : memref<32x32xbf16, #tpu.memory_space<vmem>>, vector<32x32xbf16>
    %cst_59 = arith.constant dense<0.000000e+00> : vector<2x32xf32>
    %85 = tpu.matmul %83, %84, %cst_59 {dimension_numbers = #tpu.dot_dimension_numbers<[1], [0], [0], [1], [0, 0, 1, 1], [], []>} : vector<2x32xbf16>, vector<32x32xbf16>, vector<2x32xf32> -> vector<2x32xf32>
    %86 = arith.truncf %49 : vector<16x32xf32> to vector<16x32xbf16>
    %cst_60 = arith.constant dense<0.000000e+00> : vector<16x32xf32>
    %87 = tpu.matmul %86, %77, %cst_60 {dimension_numbers = #tpu.dot_dimension_numbers<[1], [0], [0], [1], [0, 0, 1, 1], [], []>} : vector<16x32xbf16>, vector<32x32xbf16>, vector<16x32xf32> -> vector<16x32xf32>
    %88 = vector.broadcast %78 : vector<1x32xf32> to vector<16x32xf32>
    %89 = arith.addf %87, %88 : vector<16x32xf32>
    %90 = vector.shape_cast %89 : vector<16x32xf32> to vector<2x8x32xf32>
    %91 = vector.shape_cast %85 : vector<2x32xf32> to vector<2x1x32xf32>
    %92 = vector.broadcast %91 : vector<2x1x32xf32> to vector<2x8x32xf32>
    %93 = arith.addf %90, %92 : vector<2x8x32xf32>
    %cst_61 = arith.constant 0.000000e+00 : f32
    %94 = vector.broadcast %cst_61 : f32 to vector<2x8x32xf32>
    %95 = arith.maximumf %93, %94 : vector<2x8x32xf32>
    %96 = arith.extf %79 : vector<1x32xbf16> to vector<1x32xf32>
    %97 = vector.shape_cast %96 : vector<1x32xf32> to vector<1x1x32xf32>
    %98 = vector.broadcast %97 : vector<1x1x32xf32> to vector<2x8x32xf32>
    %99 = arith.mulf %95, %98 : vector<2x8x32xf32>
    %cst_62 = arith.constant dense<0.000000e+00> : vector<2x8xf32>
    %100 = vector.multi_reduction <add>, %99, %cst_62 [2] : vector<2x8x32xf32> to vector<2x8xf32>
    %101 = vector.broadcast %80 : vector<1x1xf32> to vector<2x8xf32>
    %102 = arith.addf %100, %101 : vector<2x8xf32>
    %cst_63 = arith.constant 0.000000e+00 : f32
    %103 = vector.broadcast %cst_63 : f32 to vector<2x8xf32>
    %104 = arith.cmpf ogt, %76, %103 : vector<2x8xf32>
    %cst_64 = arith.constant -1.000000e+30 : f32
    %105 = vector.broadcast %cst_64 : f32 to vector<2x8xf32>
    %106 = arith.select %104, %102, %105 : vector<2x8xi1>, vector<2x8xf32>
    %cst_65 = arith.constant dense<0xFF800000> : vector<2xf32>
    %107 = vector.multi_reduction <maximumf>, %106, %cst_65 [1] : vector<2x8xf32> to vector<2xf32>
    %108 = vector.shape_cast %107 : vector<2xf32> to vector<2x1xf32>
    %cst_66 = arith.constant 0.000000e+00 : f32
    %109 = vector.broadcast %cst_66 : f32 to vector<2x1xf32>
    %110 = arith.maximumf %108, %109 : vector<2x1xf32>
    %111 = vector.broadcast %110 : vector<2x1xf32> to vector<2x8xf32>
    %112 = arith.subf %106, %111 : vector<2x8xf32>
    %113 = math.exp %112 : vector<2x8xf32>
    %cst_67 = arith.constant dense<0.000000e+00> : vector<2xf32>
    %114 = vector.multi_reduction <add>, %113, %cst_67 [1] : vector<2x8xf32> to vector<2xf32>
    %115 = vector.shape_cast %114 : vector<2xf32> to vector<2x1xf32>
    %cst_68 = arith.constant 0.000000e+00 : f32
    %116 = vector.broadcast %cst_68 : f32 to vector<2x1xf32>
    %117 = arith.subf %116, %110 : vector<2x1xf32>
    %118 = math.exp %117 : vector<2x1xf32>
    %cst_69 = arith.constant 1.000000e-10 : f32
    %119 = vector.broadcast %cst_69 : f32 to vector<2x1xf32>
    %120 = arith.mulf %119, %118 : vector<2x1xf32>
    %121 = arith.addf %115, %120 : vector<2x1xf32>
    %122 = tpu.reciprocal %121 {approx = true} : vector<2x1xf32> -> vector<2x1xf32>
    %123 = vector.broadcast %122 : vector<2x1xf32> to vector<2x8xf32>
    %124 = arith.mulf %113, %123 : vector<2x8xf32>
    %125 = vector.shape_cast %124 : vector<2x8xf32> to vector<2x8x1xf32>
    %126 = vector.shape_cast %49 : vector<16x32xf32> to vector<2x8x32xf32>
    %127 = vector.broadcast %125 : vector<2x8x1xf32> to vector<2x8x32xf32>
    %128 = arith.mulf %127, %126 : vector<2x8x32xf32>
    %cst_70 = arith.constant dense<0.000000e+00> : vector<2x32xf32>
    %129 = vector.multi_reduction <add>, %128, %cst_70 [1] : vector<2x8x32xf32> to vector<2x32xf32>
    %130 = arith.truncf %129 : vector<2x32xf32> to vector<2x32xbf16>
    %cst_71 = arith.constant dense<0.000000e+00> : vector<2x32xf32>
    %131 = tpu.matmul %130, %81, %cst_71 {dimension_numbers = #tpu.dot_dimension_numbers<[1], [0], [0], [1], [0, 0, 1, 1], [], []>} : vector<2x32xbf16>, vector<32x32xbf16>, vector<2x32xf32> -> vector<2x32xf32>
    %132 = vector.broadcast %82 : vector<1x32xf32> to vector<2x32xf32>
    %133 = arith.addf %131, %132 : vector<2x32xf32>
    %cst_72 = arith.constant 0.000000e+00 : f32
    %134 = vector.broadcast %cst_72 : f32 to vector<2x32xf32>
    %135 = arith.maximumf %133, %134 : vector<2x32xf32>
    %136 = arith.truncf %71 : vector<16x32xf32> to vector<16x32xbf16>
    %cst_73 = arith.constant dense<0.000000e+00> : vector<16x32xf32>
    %137 = tpu.matmul %136, %77, %cst_73 {dimension_numbers = #tpu.dot_dimension_numbers<[1], [0], [0], [1], [0, 0, 1, 1], [], []>} : vector<16x32xbf16>, vector<32x32xbf16>, vector<16x32xf32> -> vector<16x32xf32>
    %138 = vector.broadcast %78 : vector<1x32xf32> to vector<16x32xf32>
    %139 = arith.addf %137, %138 : vector<16x32xf32>
    %140 = vector.shape_cast %139 : vector<16x32xf32> to vector<2x8x32xf32>
    %141 = vector.shape_cast %85 : vector<2x32xf32> to vector<2x1x32xf32>
    %142 = vector.broadcast %141 : vector<2x1x32xf32> to vector<2x8x32xf32>
    %143 = arith.addf %140, %142 : vector<2x8x32xf32>
    %cst_74 = arith.constant 0.000000e+00 : f32
    %144 = vector.broadcast %cst_74 : f32 to vector<2x8x32xf32>
    %145 = arith.maximumf %143, %144 : vector<2x8x32xf32>
    %146 = arith.extf %79 : vector<1x32xbf16> to vector<1x32xf32>
    %147 = vector.shape_cast %146 : vector<1x32xf32> to vector<1x1x32xf32>
    %148 = vector.broadcast %147 : vector<1x1x32xf32> to vector<2x8x32xf32>
    %149 = arith.mulf %145, %148 : vector<2x8x32xf32>
    %cst_75 = arith.constant dense<0.000000e+00> : vector<2x8xf32>
    %150 = vector.multi_reduction <add>, %149, %cst_75 [2] : vector<2x8x32xf32> to vector<2x8xf32>
    %151 = vector.broadcast %80 : vector<1x1xf32> to vector<2x8xf32>
    %152 = arith.addf %150, %151 : vector<2x8xf32>
    %cst_76 = arith.constant 0.000000e+00 : f32
    %153 = vector.broadcast %cst_76 : f32 to vector<2x8xf32>
    %154 = arith.cmpf ogt, %76, %153 : vector<2x8xf32>
    %cst_77 = arith.constant -1.000000e+30 : f32
    %155 = vector.broadcast %cst_77 : f32 to vector<2x8xf32>
    %156 = arith.select %154, %152, %155 : vector<2x8xi1>, vector<2x8xf32>
    %cst_78 = arith.constant dense<0xFF800000> : vector<2xf32>
    %157 = vector.multi_reduction <maximumf>, %156, %cst_78 [1] : vector<2x8xf32> to vector<2xf32>
    %158 = vector.shape_cast %157 : vector<2xf32> to vector<2x1xf32>
    %cst_79 = arith.constant 0.000000e+00 : f32
    %159 = vector.broadcast %cst_79 : f32 to vector<2x1xf32>
    %160 = arith.maximumf %158, %159 : vector<2x1xf32>
    %161 = vector.broadcast %160 : vector<2x1xf32> to vector<2x8xf32>
    %162 = arith.subf %156, %161 : vector<2x8xf32>
    %163 = math.exp %162 : vector<2x8xf32>
    %cst_80 = arith.constant dense<0.000000e+00> : vector<2xf32>
    %164 = vector.multi_reduction <add>, %163, %cst_80 [1] : vector<2x8xf32> to vector<2xf32>
    %165 = vector.shape_cast %164 : vector<2xf32> to vector<2x1xf32>
    %cst_81 = arith.constant 0.000000e+00 : f32
    %166 = vector.broadcast %cst_81 : f32 to vector<2x1xf32>
    %167 = arith.subf %166, %160 : vector<2x1xf32>
    %168 = math.exp %167 : vector<2x1xf32>
    %cst_82 = arith.constant 1.000000e-10 : f32
    %169 = vector.broadcast %cst_82 : f32 to vector<2x1xf32>
    %170 = arith.mulf %169, %168 : vector<2x1xf32>
    %171 = arith.addf %165, %170 : vector<2x1xf32>
    %172 = tpu.reciprocal %171 {approx = true} : vector<2x1xf32> -> vector<2x1xf32>
    %173 = vector.broadcast %172 : vector<2x1xf32> to vector<2x8xf32>
    %174 = arith.mulf %163, %173 : vector<2x8xf32>
    %175 = vector.shape_cast %174 : vector<2x8xf32> to vector<2x8x1xf32>
    %176 = vector.shape_cast %71 : vector<16x32xf32> to vector<2x8x32xf32>
    %177 = vector.broadcast %175 : vector<2x8x1xf32> to vector<2x8x32xf32>
    %178 = arith.mulf %177, %176 : vector<2x8x32xf32>
    %cst_83 = arith.constant dense<0.000000e+00> : vector<2x32xf32>
    %179 = vector.multi_reduction <add>, %178, %cst_83 [1] : vector<2x8x32xf32> to vector<2x32xf32>
    %180 = arith.truncf %179 : vector<2x32xf32> to vector<2x32xbf16>
    %cst_84 = arith.constant dense<0.000000e+00> : vector<2x32xf32>
    %181 = tpu.matmul %180, %81, %cst_84 {dimension_numbers = #tpu.dot_dimension_numbers<[1], [0], [0], [1], [0, 0, 1, 1], [], []>} : vector<2x32xbf16>, vector<32x32xbf16>, vector<2x32xf32> -> vector<2x32xf32>
    %182 = vector.broadcast %82 : vector<1x32xf32> to vector<2x32xf32>
    %183 = arith.addf %181, %182 : vector<2x32xf32>
    %cst_85 = arith.constant 0.000000e+00 : f32
    %184 = vector.broadcast %cst_85 : f32 to vector<2x32xf32>
    %185 = arith.maximumf %183, %184 : vector<2x32xf32>
    %186 = arith.truncf %135 : vector<2x32xf32> to vector<2x32xbf16>
    %c0_86 = arith.constant 0 : index
    %c0_87 = arith.constant 0 : index
    %187 = vector.load %arg22[%c0_86, %c0_87] : memref<32x32xbf16, #tpu.memory_space<vmem>>, vector<32x32xbf16>
    %cst_88 = arith.constant dense<0.000000e+00> : vector<2x32xf32>
    %188 = tpu.matmul %186, %187, %cst_88 {dimension_numbers = #tpu.dot_dimension_numbers<[1], [0], [0], [1], [0, 0, 1, 1], [], []>} : vector<2x32xbf16>, vector<32x32xbf16>, vector<2x32xf32> -> vector<2x32xf32>
    %189 = arith.truncf %185 : vector<2x32xf32> to vector<2x32xbf16>
    %c0_89 = arith.constant 0 : index
    %c0_90 = arith.constant 0 : index
    %190 = vector.load %arg23[%c0_89, %c0_90] : memref<32x32xbf16, #tpu.memory_space<vmem>>, vector<32x32xbf16>
    %cst_91 = arith.constant dense<0.000000e+00> : vector<2x32xf32>
    %191 = tpu.matmul %189, %190, %cst_91 {dimension_numbers = #tpu.dot_dimension_numbers<[1], [0], [0], [1], [0, 0, 1, 1], [], []>} : vector<2x32xbf16>, vector<32x32xbf16>, vector<2x32xf32> -> vector<2x32xf32>
    %192 = arith.addf %188, %191 : vector<2x32xf32>
    %c0_92 = arith.constant 0 : index
    %c0_93 = arith.constant 0 : index
    %193 = vector.load %arg24[%c0_92, %c0_93] : memref<1x32xf32, #tpu.memory_space<vmem>>, vector<1x32xf32>
    %194 = vector.broadcast %193 : vector<1x32xf32> to vector<2x32xf32>
    %195 = arith.addf %192, %194 : vector<2x32xf32>
    %cst_94 = arith.constant 0.000000e+00 : f32
    %196 = vector.broadcast %cst_94 : f32 to vector<2x32xf32>
    %197 = arith.maximumf %195, %196 : vector<2x32xf32>
    %198 = arith.truncf %197 : vector<2x32xf32> to vector<2x32xbf16>
    %c0_95 = arith.constant 0 : index
    %c0_96 = arith.constant 0 : index
    %199 = vector.load %arg25[%c0_95, %c0_96] : memref<32x32xbf16, #tpu.memory_space<vmem>>, vector<32x32xbf16>
    %cst_97 = arith.constant dense<0.000000e+00> : vector<2x32xf32>
    %200 = tpu.matmul %198, %199, %cst_97 {dimension_numbers = #tpu.dot_dimension_numbers<[1], [0], [0], [1], [0, 0, 1, 1], [], []>} : vector<2x32xbf16>, vector<32x32xbf16>, vector<2x32xf32> -> vector<2x32xf32>
    %c0_98 = arith.constant 0 : index
    %c0_99 = arith.constant 0 : index
    %201 = vector.load %arg26[%c0_98, %c0_99] : memref<1x32xf32, #tpu.memory_space<vmem>>, vector<1x32xf32>
    %202 = vector.broadcast %201 : vector<1x32xf32> to vector<2x32xf32>
    %203 = arith.addf %200, %202 : vector<2x32xf32>
    %cst_100 = arith.constant 0.000000e+00 : f32
    %204 = vector.broadcast %cst_100 : f32 to vector<2x32xf32>
    %205 = arith.maximumf %203, %204 : vector<2x32xf32>
    %206 = arith.truncf %205 : vector<2x32xf32> to vector<2x32xbf16>
    %c0_101 = arith.constant 0 : index
    %c0_102 = arith.constant 0 : index
    %207 = vector.load %arg27[%c0_101, %c0_102] : memref<32x32xbf16, #tpu.memory_space<vmem>>, vector<32x32xbf16>
    %cst_103 = arith.constant dense<0.000000e+00> : vector<2x32xf32>
    %208 = tpu.matmul %206, %207, %cst_103 {dimension_numbers = #tpu.dot_dimension_numbers<[1], [0], [0], [1], [0, 0, 1, 1], [], []>} : vector<2x32xbf16>, vector<32x32xbf16>, vector<2x32xf32> -> vector<2x32xf32>
    %c0_104 = arith.constant 0 : index
    %c0_105 = arith.constant 0 : index
    %209 = vector.load %arg28[%c0_104, %c0_105] : memref<1x32xf32, #tpu.memory_space<vmem>>, vector<1x32xf32>
    %210 = vector.broadcast %209 : vector<1x32xf32> to vector<2x32xf32>
    %211 = arith.addf %208, %210 : vector<2x32xf32>
    %cst_106 = arith.constant 0.000000e+00 : f32
    %212 = vector.broadcast %cst_106 : f32 to vector<2x32xf32>
    %213 = arith.maximumf %211, %212 : vector<2x32xf32>
    %c0_107 = arith.constant 0 : index
    %c0_108 = arith.constant 0 : index
    %214 = vector.load %arg29[%c0_107, %c0_108] : memref<2x32xf32, #tpu.memory_space<vmem>>, vector<2x32xf32>
    tpu.vector_store %arg29[%c0_107, %c0_108], %213 {strides = array<i32>} : memref<2x32xf32, #tpu.memory_space<vmem>>, vector<2x32xf32>,
    return
  }
  func.func @transform_0(%arg0: i32) -> (i32, i32) {
    %c0_i32 = arith.constant 0 : i32
    %c0_i32_0 = arith.constant 0 : i32
    return %arg0, %c0_i32 : i32, i32
  }
  func.func @transform_1(%arg0: i32) -> (i32, i32) {
    %c0_i32 = arith.constant 0 : i32
    %c0_i32_0 = arith.constant 0 : i32
    return %arg0, %c0_i32 : i32, i32
  }
  func.func @transform_2(%arg0: i32) -> (i32, i32) {
    %c0_i32 = arith.constant 0 : i32
    %c0_i32_0 = arith.constant 0 : i32
    return %arg0, %c0_i32 : i32, i32
  }
  func.func @transform_3(%arg0: i32) -> (i32, i32) {
    %c0_i32 = arith.constant 0 : i32
    %c0_i32_0 = arith.constant 0 : i32
    return %arg0, %c0_i32 : i32, i32
  }
  func.func @transform_4(%arg0: i32) -> (i32, i32) {
    %c0_i32 = arith.constant 0 : i32
    %c0_i32_0 = arith.constant 0 : i32
    return %arg0, %c0_i32 : i32, i32
  }
  func.func @transform_5(%arg0: i32) -> (i32, i32) {
    %c0_i32 = arith.constant 0 : i32
    %c0_i32_0 = arith.constant 0 : i32
    return %arg0, %c0_i32 : i32, i32
  }
  func.func @transform_6(%arg0: i32) -> (i32, i32) {
    %c0_i32 = arith.constant 0 : i32
    %c0_i32_0 = arith.constant 0 : i32
    %c0_i32_1 = arith.constant 0 : i32
    return %c0_i32, %c0_i32_0 : i32, i32
  }
  func.func @transform_7(%arg0: i32) -> (i32, i32) {
    %c0_i32 = arith.constant 0 : i32
    %c0_i32_0 = arith.constant 0 : i32
    %c0_i32_1 = arith.constant 0 : i32
    return %c0_i32, %c0_i32_0 : i32, i32
  }
  func.func @transform_8(%arg0: i32) -> (i32, i32) {
    %c0_i32 = arith.constant 0 : i32
    %c0_i32_0 = arith.constant 0 : i32
    %c0_i32_1 = arith.constant 0 : i32
    return %c0_i32, %c0_i32_0 : i32, i32
  }
  func.func @transform_9(%arg0: i32) -> (i32, i32) {
    %c0_i32 = arith.constant 0 : i32
    %c0_i32_0 = arith.constant 0 : i32
    %c0_i32_1 = arith.constant 0 : i32
    return %c0_i32, %c0_i32_0 : i32, i32
  }
  func.func @transform_10(%arg0: i32) -> (i32, i32) {
    %c0_i32 = arith.constant 0 : i32
    %c0_i32_0 = arith.constant 0 : i32
    %c0_i32_1 = arith.constant 0 : i32
    return %c0_i32, %c0_i32_0 : i32, i32
  }
  func.func @transform_11(%arg0: i32) -> (i32, i32) {
    %c0_i32 = arith.constant 0 : i32
    %c0_i32_0 = arith.constant 0 : i32
    %c0_i32_1 = arith.constant 0 : i32
    return %c0_i32, %c0_i32_0 : i32, i32
  }
  func.func @transform_12(%arg0: i32) -> (i32, i32) {
    %c0_i32 = arith.constant 0 : i32
    %c0_i32_0 = arith.constant 0 : i32
    %c0_i32_1 = arith.constant 0 : i32
    return %c0_i32, %c0_i32_0 : i32, i32
  }
  func.func @transform_13(%arg0: i32) -> (i32, i32) {
    %c0_i32 = arith.constant 0 : i32
    %c0_i32_0 = arith.constant 0 : i32
    %c0_i32_1 = arith.constant 0 : i32
    return %c0_i32, %c0_i32_0 : i32, i32
  }
  func.func @transform_14(%arg0: i32) -> (i32, i32) {
    %c0_i32 = arith.constant 0 : i32
    %c0_i32_0 = arith.constant 0 : i32
    %c0_i32_1 = arith.constant 0 : i32
    return %c0_i32, %c0_i32_0 : i32, i32
  }
  func.func @transform_15(%arg0: i32) -> (i32, i32) {
    %c0_i32 = arith.constant 0 : i32
    %c0_i32_0 = arith.constant 0 : i32
    %c0_i32_1 = arith.constant 0 : i32
    return %c0_i32, %c0_i32_0 : i32, i32
  }
  func.func @transform_16(%arg0: i32) -> (i32, i32) {
    %c0_i32 = arith.constant 0 : i32
    %c0_i32_0 = arith.constant 0 : i32
    %c0_i32_1 = arith.constant 0 : i32
    return %c0_i32, %c0_i32_0 : i32, i32
  }
  func.func @transform_17(%arg0: i32) -> (i32, i32) {
    %c0_i32 = arith.constant 0 : i32
    %c0_i32_0 = arith.constant 0 : i32
    %c0_i32_1 = arith.constant 0 : i32
    return %c0_i32, %c0_i32_0 : i32, i32
  }
  func.func @transform_18(%arg0: i32) -> (i32, i32) {
    %c0_i32 = arith.constant 0 : i32
    %c0_i32_0 = arith.constant 0 : i32
    %c0_i32_1 = arith.constant 0 : i32
    return %c0_i32, %c0_i32_0 : i32, i32
  }
  func.func @transform_19(%arg0: i32) -> (i32, i32) {
    %c0_i32 = arith.constant 0 : i32
    %c0_i32_0 = arith.constant 0 : i32
    %c0_i32_1 = arith.constant 0 : i32
    return %c0_i32, %c0_i32_0 : i32, i32
  }
  func.func @transform_20(%arg0: i32) -> (i32, i32) {
    %c0_i32 = arith.constant 0 : i32
    %c0_i32_0 = arith.constant 0 : i32
    %c0_i32_1 = arith.constant 0 : i32
    return %c0_i32, %c0_i32_0 : i32, i32
  }
  func.func @transform_21(%arg0: i32) -> (i32, i32) {
    %c0_i32 = arith.constant 0 : i32
    %c0_i32_0 = arith.constant 0 : i32
    %c0_i32_1 = arith.constant 0 : i32
    return %c0_i32, %c0_i32_0 : i32, i32
  }
  func.func @transform_22(%arg0: i32) -> (i32, i32) {
    %c0_i32 = arith.constant 0 : i32
    %c0_i32_0 = arith.constant 0 : i32
    %c0_i32_1 = arith.constant 0 : i32
    return %c0_i32, %c0_i32_0 : i32, i32
  }
  func.func @transform_23(%arg0: i32) -> (i32, i32) {
    %c0_i32 = arith.constant 0 : i32
    %c0_i32_0 = arith.constant 0 : i32
    %c0_i32_1 = arith.constant 0 : i32
    return %c0_i32, %c0_i32_0 : i32, i32
  }
  func.func @transform_24(%arg0: i32) -> (i32, i32) {
    %c0_i32 = arith.constant 0 : i32
    %c0_i32_0 = arith.constant 0 : i32
    %c0_i32_1 = arith.constant 0 : i32
    return %c0_i32, %c0_i32_0 : i32, i32
  }
  func.func @transform_25(%arg0: i32) -> (i32, i32) {
    %c0_i32 = arith.constant 0 : i32
    %c0_i32_0 = arith.constant 0 : i32
    %c0_i32_1 = arith.constant 0 : i32
    return %c0_i32, %c0_i32_0 : i32, i32
  }
  func.func @transform_26(%arg0: i32) -> (i32, i32) {
    %c0_i32 = arith.constant 0 : i32
    %c0_i32_0 = arith.constant 0 : i32
    %c0_i32_1 = arith.constant 0 : i32
    return %c0_i32, %c0_i32_0 : i32, i32
  }
  func.func @transform_27(%arg0: i32) -> (i32, i32) {
    %c0_i32 = arith.constant 0 : i32
    %c0_i32_0 = arith.constant 0 : i32
    %c0_i32_1 = arith.constant 0 : i32
    return %c0_i32, %c0_i32_0 : i32, i32
  }
  func.func @transform_28(%arg0: i32) -> (i32, i32) {
    %c0_i32 = arith.constant 0 : i32
    %c0_i32_0 = arith.constant 0 : i32
    return %arg0, %c0_i32 : i32, i32
  }
}

</mosaic_0001>

<llo_original>
// kernel: tpu_custom_call.1
$region0: #{tpu_custom_call.1}
  #allocation0 [shape = 'u32[]', space=smem, size = 0x4, offset = 0x4, fixed_abs, tag = 'smem constant byte address 0x4 - core index']
  #allocation1 [shape = 'u32[144,128]{1,0:T(1,128)}', space=vmem, size = 0x12000, scoped, tag = 'internal scratch']
  #allocation2 [shape = 'f32[1,1]{1,0:T(1,128)S(1)}', space=vmem, size = 0x200, scoped, tag = 'scoped memory for tpu_custom_call.1']
  %s0 = inlined_call_operand.hbm [shape: bf16[16,32], index: 0, kind: input, shape index: {}]
  %s1 = inlined_call_operand.hbm [shape: bf16[2,32], index: 1, kind: input, shape index: {}]
  %s2 = inlined_call_operand.hbm [shape: s32[2,8], index: 2, kind: input, shape index: {}]
  %s3 = inlined_call_operand.vmem [shape: s32[16,1], index: 3, kind: input, shape index: {}]
  %s4 = inlined_call_operand.vmem [shape: s32[16,1], index: 4, kind: input, shape index: {}]
  %s5 = inlined_call_operand.vmem [shape: s32[16,1], index: 5, kind: input, shape index: {}]
  %s6 = inlined_call_operand.hbm [shape: bf16[8,32], index: 6, kind: input, shape index: {}]
  %s7 = inlined_call_operand.hbm [shape: bf16[8,32], index: 7, kind: input, shape index: {}]
  %s8 = inlined_call_operand.hbm [shape: bf16[8,32], index: 8, kind: input, shape index: {}]
  %s9 = inlined_call_operand.vmem [shape: bf16[32,32], index: 9, kind: input, shape index: {}]
  %s10 = inlined_call_operand.vmem [shape: bf16[32,32], index: 10, kind: input, shape index: {}]
  %s11 = inlined_call_operand.hbm [shape: f32[1,32], index: 11, kind: input, shape index: {}]
  %s12 = inlined_call_operand.vmem [shape: bf16[32,32], index: 12, kind: input, shape index: {}]
  %s13 = inlined_call_operand.vmem [shape: f32[1,32], index: 13, kind: input, shape index: {}]
  %s14 = inlined_call_operand.vmem [shape: bf16[32,32], index: 14, kind: input, shape index: {}]
  %s15 = inlined_call_operand.vmem [shape: bf16[32,32], index: 15, kind: input, shape index: {}]
  %s16 = inlined_call_operand.hbm [shape: f32[1,32], index: 16, kind: input, shape index: {}]
  %s17 = inlined_call_operand.hbm [shape: bf16[1,32], index: 17, kind: input, shape index: {}]
  %s18 = inlined_call_operand.<no memory space> [shape: f32[1,1], index: 18, kind: input, shape index: {}]
  %s19 = inlined_call_operand.vmem [shape: bf16[32,32], index: 19, kind: input, shape index: {}]
  %s20 = inlined_call_operand.hbm [shape: f32[1,32], index: 20, kind: input, shape index: {}]
  %s21 = inlined_call_operand.vmem [shape: bf16[32,32], index: 21, kind: input, shape index: {}]
  %s22 = inlined_call_operand.vmem [shape: bf16[32,32], index: 22, kind: input, shape index: {}]
  %s23 = inlined_call_operand.hbm [shape: f32[1,32], index: 23, kind: input, shape index: {}]
  %s24 = inlined_call_operand.hbm [shape: bf16[32,32], index: 24, kind: input, shape index: {}]
  %s25 = inlined_call_operand.hbm [shape: f32[1,32], index: 25, kind: input, shape index: {}]
  %s26 = inlined_call_operand.vmem [shape: bf16[32,32], index: 26, kind: input, shape index: {}]
  %s27 = inlined_call_operand.vmem [shape: f32[1,32], index: 27, kind: input, shape index: {}]
  %s28 = inlined_call_operand.hbm [shape: f32[2,32], index: 28, kind: output, shape index: {}]
  %s29 = sld [smem:[#allocation0]]
  $region174: #{tpu_custom_call.1} parent=0
    _
  %s31 = ssub.s32 1, %s29
  %s32 = scalar_select 0, %s31, %s29
  %v33 = vstv %s18
  %34 = vst [vmem:[#allocation2] sm:$0x1] %v33
  $region1: #{tpu_custom_call.1} parent=0
    #allocation3 [shape = 'u8[4096]{0}', space=vmem, size = 0x1000, scoped, tag = 'input window, operand 0, single buffered']
    #allocation4 [shape = 's32[1]{0}', space=sflag, size = 0x4, scoped, tag = 'scoped memory for tpu_custom_call.1']
    #allocation5 [shape = 's32[1]{0}', space=sflag, size = 0x4, scoped, tag = 'scoped memory for tpu_custom_call.1']
    #allocation6 [shape = 'u8[512]{0}', space=vmem, size = 0x400, scoped, tag = 'input window, operand 1, single buffered']
    #allocation7 [shape = 's32[1]{0}', space=sflag, size = 0x4, scoped, tag = 'scoped memory for tpu_custom_call.1']
    #allocation8 [shape = 'u8[1024]{0}', space=vmem, size = 0x400, scoped, tag = 'input window, operand 2, single buffered']
    #allocation9 [shape = 'u8[2048]{0}', space=vmem, size = 0x800, scoped, tag = 'input window, operand 6, single buffered']
    #allocation10 [shape = 's32[1]{0}', space=sflag, size = 0x4, scoped, tag = 'scoped memory for tpu_custom_call.1']
    #allocation11 [shape = 'u8[2048]{0}', space=vmem, size = 0x800, scoped, tag = 'input window, operand 7, single buffered']
    #allocation12 [shape = 'u8[2048]{0}', space=vmem, size = 0x800, scoped, tag = 'input window, operand 8, single buffered']
    #allocation13 [shape = 's32[1]{0}', space=sflag, size = 0x4, scoped, tag = 'scoped memory for tpu_custom_call.1']
    #allocation14 [shape = 'u8[512]{0}', space=vmem, size = 0x400, scoped, tag = 'input window, operand 11, single buffered']
    #allocation15 [shape = 'u8[512]{0}', space=vmem, size = 0x400, scoped, tag = 'input window, operand 16, single buffered']
    #allocation16 [shape = 's32[1]{0}', space=sflag, size = 0x4, scoped, tag = 'scoped memory for tpu_custom_call.1']
    #allocation17 [shape = 'u8[512]{0}', space=vmem, size = 0x400, scoped, tag = 'input window, operand 17, single buffered']
    #allocation18 [shape = 'u8[512]{0}', space=vmem, size = 0x400, scoped, tag = 'input window, operand 20, single buffered']
    #allocation19 [shape = 's32[1]{0}', space=sflag, size = 0x4, scoped, tag = 'scoped memory for tpu_custom_call.1']
    #allocation20 [shape = 'u8[512]{0}', space=vmem, size = 0x400, scoped, tag = 'input window, operand 23, single buffered']
    #allocation21 [shape = 'u8[8192]{0}', space=vmem, size = 0x2000, scoped, tag = 'input window, operand 24, single buffered']
    #allocation22 [shape = 's32[1]{0}', space=sflag, size = 0x4, scoped, tag = 'scoped memory for tpu_custom_call.1']
    #allocation23 [shape = 'u8[512]{0}', space=vmem, size = 0x400, scoped, tag = 'input window, operand 25, single buffered']
    #allocation24 [shape = 'u8[1024]{0}', space=vmem, size = 0x400, scoped, tag = 'output window, operand 0, single buffered']
    %35 = vsyncpa [#allocation4], 0
    %36 = vsyncpa [#allocation7], 0
    %37 = vsyncpa [#allocation10], 0
    %38 = vsyncpa [#allocation13], 0
    %39 = vsyncpa [#allocation16], 0
    %40 = vsyncpa [#allocation19], 0
    %41 = vsyncpa [#allocation22], 0
    %42 = vsyncpa [#allocation5], 0
    // Predicated region
    $region2: #{tpu_custom_call.1} parent=1 // pred_check
      _
    $region3: #{tpu_custom_call.1} parent=1 // pred_check_branch
      %44 = sbr.rel (0) target = $region5
    $region4: #{tpu_custom_call.1} parent=1 // pred_region
      %s46 = ssub.s32 128, 128
      %47 = vsyncadd [#allocation4], %s46
      %s48 = sshll.u32 [#allocation3], 4
      %s49 = int_to_ptr.vmem [resolvable:$true] %s48
      %54 = dma.hbm_to_vmem [thread:$0]  %s0, 128, %s49, [#allocation4], 64, 64, 4
    $region5: #{tpu_custom_call.1} parent=1 // pred_fallthru
      _
    // Predicated region
    $region6: #{tpu_custom_call.1} parent=1 // pred_check
      _
    $region7: #{tpu_custom_call.1} parent=1 // pred_check_branch
      %56 = sbr.rel (0) target = $region9
    $region8: #{tpu_custom_call.1} parent=1 // pred_region
      %s58 = ssub.s32 16, 16
      %59 = vsyncadd [#allocation7], %s58
      %s61 = sshll.u32 [#allocation6], 4
      %s62 = int_to_ptr.vmem [resolvable:$true] %s61
      %64 = dma.hbm_to_vmem [thread:$0]  %s1, 16, %s62, [#allocation7]
    $region9: #{tpu_custom_call.1} parent=1 // pred_fallthru
      _
    // Predicated region
    $region10: #{tpu_custom_call.1} parent=1 // pred_check
      _
    $region11: #{tpu_custom_call.1} parent=1 // pred_check_branch
      %66 = sbr.rel (0) target = $region13
    $region12: #{tpu_custom_call.1} parent=1 // pred_region
      %s68 = ssub.s32 32, 32
      %69 = vsyncadd [#allocation7], %s68
      %s71 = sshll.u32 [#allocation8], 4
      %s72 = int_to_ptr.vmem [resolvable:$true] %s71
      %74 = dma.hbm_to_vmem [thread:$0]  %s2, 32, %s72, [#allocation7]
    $region13: #{tpu_custom_call.1} parent=1 // pred_fallthru
      _
    // Predicated region
    $region14: #{tpu_custom_call.1} parent=1 // pred_check
      _
    $region15: #{tpu_custom_call.1} parent=1 // pred_check_branch
      %76 = sbr.rel (0) target = $region17
    $region16: #{tpu_custom_call.1} parent=1 // pred_region
      _
    $region17: #{tpu_custom_call.1} parent=1 // pred_fallthru
      _
    // Predicated region
    $region18: #{tpu_custom_call.1} parent=1 // pred_check
      _
    $region19: #{tpu_custom_call.1} parent=1 // pred_check_branch
      %78 = sbr.rel (0) target = $region21
    $region20: #{tpu_custom_call.1} parent=1 // pred_region
      _
    $region21: #{tpu_custom_call.1} parent=1 // pred_fallthru
      _
    // Predicated region
    $region22: #{tpu_custom_call.1} parent=1 // pred_check
      _
    $region23: #{tpu_custom_call.1} parent=1 // pred_check_branch
      %80 = sbr.rel (0) target = $region25
    $region24: #{tpu_custom_call.1} parent=1 // pred_region
      _
    $region25: #{tpu_custom_call.1} parent=1 // pred_fallthru
      _
    // Predicated region
    $region26: #{tpu_custom_call.1} parent=1 // pred_check
      _
    $region27: #{tpu_custom_call.1} parent=1 // pred_check_branch
      %82 = sbr.rel (0) target = $region29
    $region28: #{tpu_custom_call.1} parent=1 // pred_region
      %s84 = ssub.s32 64, 64
      %85 = vsyncadd [#allocation10], %s84
      %s87 = sshll.u32 [#allocation9], 4
      %s88 = int_to_ptr.vmem [resolvable:$true] %s87
      %90 = dma.hbm_to_vmem [thread:$0]  %s6, 64, %s88, [#allocation10]
    $region29: #{tpu_custom_call.1} parent=1 // pred_fallthru
      _
    // Predicated region
    $region30: #{tpu_custom_call.1} parent=1 // pred_check
      _
    $region31: #{tpu_custom_call.1} parent=1 // pred_check_branch
      %92 = sbr.rel (0) target = $region33
    $region32: #{tpu_custom_call.1} parent=1 // pred_region
      %s94 = ssub.s32 64, 64
      %95 = vsyncadd [#allocation10], %s94
      %s97 = sshll.u32 [#allocation11], 4
      %s98 = int_to_ptr.vmem [resolvable:$true] %s97
      %100 = dma.hbm_to_vmem [thread:$0]  %s7, 64, %s98, [#allocation10]
    $region33: #{tpu_custom_call.1} parent=1 // pred_fallthru
      _
    // Predicated region
    $region34: #{tpu_custom_call.1} parent=1 // pred_check
      _
    $region35: #{tpu_custom_call.1} parent=1 // pred_check_branch
      %102 = sbr.rel (0) target = $region37
    $region36: #{tpu_custom_call.1} parent=1 // pred_region
      %s104 = ssub.s32 64, 64
      %105 = vsyncadd [#allocation13], %s104
      %s107 = sshll.u32 [#allocation12], 4
      %s108 = int_to_ptr.vmem [resolvable:$true] %s107
      %110 = dma.hbm_to_vmem [thread:$0]  %s8, 64, %s108, [#allocation13]
    $region37: #{tpu_custom_call.1} parent=1 // pred_fallthru
      _
    // Predicated region
    $region38: #{tpu_custom_call.1} parent=1 // pred_check
      _
    $region39: #{tpu_custom_call.1} parent=1 // pred_check_branch
      %112 = sbr.rel (0) target = $region41
    $region40: #{tpu_custom_call.1} parent=1 // pred_region
      _
    $region41: #{tpu_custom_call.1} parent=1 // pred_fallthru
      _
    // Predicated region
    $region42: #{tpu_custom_call.1} parent=1 // pred_check
      _
    $region43: #{tpu_custom_call.1} parent=1 // pred_check_branch
      %114 = sbr.rel (0) target = $region45
    $region44: #{tpu_custom_call.1} parent=1 // pred_region
      _
    $region45: #{tpu_custom_call.1} parent=1 // pred_fallthru
      _
    // Predicated region
    $region46: #{tpu_custom_call.1} parent=1 // pred_check
      _
    $region47: #{tpu_custom_call.1} parent=1 // pred_check_branch
      %116 = sbr.rel (0) target = $region49
    $region48: #{tpu_custom_call.1} parent=1 // pred_region
      %s118 = ssub.s32 16, 16
      %119 = vsyncadd [#allocation13], %s118
      %s121 = sshll.u32 [#allocation14], 4
      %s122 = int_to_ptr.vmem [resolvable:$true] %s121
      %124 = dma.hbm_to_vmem [thread:$0]  %s11, 16, %s122, [#allocation13]
    $region49: #{tpu_custom_call.1} parent=1 // pred_fallthru
      _
    // Predicated region
    $region50: #{tpu_custom_call.1} parent=1 // pred_check
      _
    $region51: #{tpu_custom_call.1} parent=1 // pred_check_branch
      %126 = sbr.rel (0) target = $region53
    $region52: #{tpu_custom_call.1} parent=1 // pred_region
      _
    $region53: #{tpu_custom_call.1} parent=1 // pred_fallthru
      _
    // Predicated region
    $region54: #{tpu_custom_call.1} parent=1 // pred_check
      _
    $region55: #{tpu_custom_call.1} parent=1 // pred_check_branch
      %128 = sbr.rel (0) target = $region57
    $region56: #{tpu_custom_call.1} parent=1 // pred_region
      _
    $region57: #{tpu_custom_call.1} parent=1 // pred_fallthru
      _
    // Predicated region
    $region58: #{tpu_custom_call.1} parent=1 // pred_check
      _
    $region59: #{tpu_custom_call.1} parent=1 // pred_check_branch
      %130 = sbr.rel (0) target = $region61
    $region60: #{tpu_custom_call.1} parent=1 // pred_region
      _
    $region61: #{tpu_custom_call.1} parent=1 // pred_fallthru
      _
    // Predicated region
    $region62: #{tpu_custom_call.1} parent=1 // pred_check
      _
    $region63: #{tpu_custom_call.1} parent=1 // pred_check_branch
      %132 = sbr.rel (0) target = $region65
    $region64: #{tpu_custom_call.1} parent=1 // pred_region
      _
    $region65: #{tpu_custom_call.1} parent=1 // pred_fallthru
      _
    // Predicated region
    $region66: #{tpu_custom_call.1} parent=1 // pred_check
      _
    $region67: #{tpu_custom_call.1} parent=1 // pred_check_branch
      %134 = sbr.rel (0) target = $region69
    $region68: #{tpu_custom_call.1} parent=1 // pred_region
      %s136 = ssub.s32 16, 16
      %137 = vsyncadd [#allocation16], %s136
      %s139 = sshll.u32 [#allocation15], 4
      %s140 = int_to_ptr.vmem [resolvable:$true] %s139
      %142 = dma.hbm_to_vmem [thread:$0]  %s16, 16, %s140, [#allocation16]
    $region69: #{tpu_custom_call.1} parent=1 // pred_fallthru
      _
    // Predicated region
    $region70: #{tpu_custom_call.1} parent=1 // pred_check
      _
    $region71: #{tpu_custom_call.1} parent=1 // pred_check_branch
      %144 = sbr.rel (0) target = $region73
    $region72: #{tpu_custom_call.1} parent=1 // pred_region
      %s146 = ssub.s32 16, 16
      %147 = vsyncadd [#allocation16], %s146
      %s149 = sshll.u32 [#allocation17], 4
      %s150 = int_to_ptr.vmem [resolvable:$true] %s149
      %152 = dma.hbm_to_vmem [thread:$0]  %s17, 16, %s150, [#allocation16]
    $region73: #{tpu_custom_call.1} parent=1 // pred_fallthru
      _
    // Predicated region
    $region74: #{tpu_custom_call.1} parent=1 // pred_check
      _
    $region75: #{tpu_custom_call.1} parent=1 // pred_check_branch
      %154 = sbr.rel (0) target = $region77
    $region76: #{tpu_custom_call.1} parent=1 // pred_region
      _
    $region77: #{tpu_custom_call.1} parent=1 // pred_fallthru
      _
    // Predicated region
    $region78: #{tpu_custom_call.1} parent=1 // pred_check
      _
    $region79: #{tpu_custom_call.1} parent=1 // pred_check_branch
      %156 = sbr.rel (0) target = $region81
    $region80: #{tpu_custom_call.1} parent=1 // pred_region
      _
    $region81: #{tpu_custom_call.1} parent=1 // pred_fallthru
      _
    // Predicated region
    $region82: #{tpu_custom_call.1} parent=1 // pred_check
      _
    $region83: #{tpu_custom_call.1} parent=1 // pred_check_branch
      %158 = sbr.rel (0) target = $region85
    $region84: #{tpu_custom_call.1} parent=1 // pred_region
      %s160 = ssub.s32 16, 16
      %161 = vsyncadd [#allocation19], %s160
      %s163 = sshll.u32 [#allocation18], 4
      %s164 = int_to_ptr.vmem [resolvable:$true] %s163
      %166 = dma.hbm_to_vmem [thread:$0]  %s20, 16, %s164, [#allocation19]
    $region85: #{tpu_custom_call.1} parent=1 // pred_fallthru
      _
    // Predicated region
    $region86: #{tpu_custom_call.1} parent=1 // pred_check
      _
    $region87: #{tpu_custom_call.1} parent=1 // pred_check_branch
      %168 = sbr.rel (0) target = $region89
    $region88: #{tpu_custom_call.1} parent=1 // pred_region
      _
    $region89: #{tpu_custom_call.1} parent=1 // pred_fallthru
      _
    // Predicated region
    $region90: #{tpu_custom_call.1} parent=1 // pred_check
      _
    $region91: #{tpu_custom_call.1} parent=1 // pred_check_branch
      %170 = sbr.rel (0) target = $region93
    $region92: #{tpu_custom_call.1} parent=1 // pred_region
      _
    $region93: #{tpu_custom_call.1} parent=1 // pred_fallthru
      _
    // Predicated region
    $region94: #{tpu_custom_call.1} parent=1 // pred_check
      _
    $region95: #{tpu_custom_call.1} parent=1 // pred_check_branch
      %172 = sbr.rel (0) target = $region97
    $region96: #{tpu_custom_call.1} parent=1 // pred_region
      %s174 = ssub.s32 16, 16
      %175 = vsyncadd [#allocation19], %s174
      %s177 = sshll.u32 [#allocation20], 4
      %s178 = int_to_ptr.vmem [resolvable:$true] %s177
      %180 = dma.hbm_to_vmem [thread:$0]  %s23, 16, %s178, [#allocation19]
    $region97: #{tpu_custom_call.1} parent=1 // pred_fallthru
      _
    // Predicated region
    $region98: #{tpu_custom_call.1} parent=1 // pred_check
      _
    $region99: #{tpu_custom_call.1} parent=1 // pred_check_branch
      %182 = sbr.rel (0) target = $region101
    $region100: #{tpu_custom_call.1} parent=1 // pred_region
      %s184 = ssub.s32 256, 256
      %185 = vsyncadd [#allocation22], %s184
      %s186 = sshll.u32 [#allocation21], 4
      %s187 = int_to_ptr.vmem [resolvable:$true] %s186
      %192 = dma.hbm_to_vmem [thread:$0]  %s24, 256, %s187, [#allocation22], 64, 64, 4
    $region101: #{tpu_custom_call.1} parent=1 // pred_fallthru
      _
    // Predicated region
    $region102: #{tpu_custom_call.1} parent=1 // pred_check
      _
    $region103: #{tpu_custom_call.1} parent=1 // pred_check_branch
      %194 = sbr.rel (0) target = $region105
    $region104: #{tpu_custom_call.1} parent=1 // pred_region
      %s196 = ssub.s32 16, 16
      %197 = vsyncadd [#allocation22], %s196
      %s199 = sshll.u32 [#allocation23], 4
      %s200 = int_to_ptr.vmem [resolvable:$true] %s199
      %202 = dma.hbm_to_vmem [thread:$0]  %s25, 16, %s200, [#allocation22]
    $region105: #{tpu_custom_call.1} parent=1 // pred_fallthru
      _
    // Predicated region
    $region106: #{tpu_custom_call.1} parent=1 // pred_check
      _
    $region107: #{tpu_custom_call.1} parent=1 // pred_check_branch
      %204 = sbr.rel (0) target = $region109
    $region108: #{tpu_custom_call.1} parent=1 // pred_region
      _
    $region109: #{tpu_custom_call.1} parent=1 // pred_fallthru
      _
    // Predicated region
    $region110: #{tpu_custom_call.1} parent=1 // pred_check
      _
    $region111: #{tpu_custom_call.1} parent=1 // pred_check_branch
      %206 = sbr.rel (0) target = $region113
    $region112: #{tpu_custom_call.1} parent=1 // pred_region
      _
    $region113: #{tpu_custom_call.1} parent=1 // pred_fallthru
      _
    // Predicated region
    $region114: #{tpu_custom_call.1} parent=1 // pred_check
      _
    $region115: #{tpu_custom_call.1} parent=1 // pred_check_branch
      %208 = sbr.rel (0) target = $region117
    $region116: #{tpu_custom_call.1} parent=1 // pred_region
      %209 = dma.done [#allocation4], 128
    $region117: #{tpu_custom_call.1} parent=1 // pred_fallthru
      _
    // Predicated region
    $region118: #{tpu_custom_call.1} parent=1 // pred_check
      _
    $region119: #{tpu_custom_call.1} parent=1 // pred_check_branch
      %211 = sbr.rel (0) target = $region121
    $region120: #{tpu_custom_call.1} parent=1 // pred_region
      %212 = dma.done [#allocation7], 16
    $region121: #{tpu_custom_call.1} parent=1 // pred_fallthru
      _
    // Predicated region
    $region122: #{tpu_custom_call.1} parent=1 // pred_check
      _
    $region123: #{tpu_custom_call.1} parent=1 // pred_check_branch
      %214 = sbr.rel (0) target = $region125
    $region124: #{tpu_custom_call.1} parent=1 // pred_region
      %215 = dma.done [#allocation7], 32
    $region125: #{tpu_custom_call.1} parent=1 // pred_fallthru
      _
    // Predicated region
    $region126: #{tpu_custom_call.1} parent=1 // pred_check
      _
    $region127: #{tpu_custom_call.1} parent=1 // pred_check_branch
      %217 = sbr.rel (0) target = $region129
    $region128: #{tpu_custom_call.1} parent=1 // pred_region
      %218 = dma.done [#allocation10], 64
    $region129: #{tpu_custom_call.1} parent=1 // pred_fallthru
      _
    // Predicated region
    $region130: #{tpu_custom_call.1} parent=1 // pred_check
      _
    $region131: #{tpu_custom_call.1} parent=1 // pred_check_branch
      %220 = sbr.rel (0) target = $region133
    $region132: #{tpu_custom_call.1} parent=1 // pred_region
      %221 = dma.done [#allocation10], 64
    $region133: #{tpu_custom_call.1} parent=1 // pred_fallthru
      _
    // Predicated region
    $region134: #{tpu_custom_call.1} parent=1 // pred_check
      _
    $region135: #{tpu_custom_call.1} parent=1 // pred_check_branch
      %223 = sbr.rel (0) target = $region137
    $region136: #{tpu_custom_call.1} parent=1 // pred_region
      %224 = dma.done [#allocation13], 64
    $region137: #{tpu_custom_call.1} parent=1 // pred_fallthru
      _
    // Predicated region
    $region138: #{tpu_custom_call.1} parent=1 // pred_check
      _
    $region139: #{tpu_custom_call.1} parent=1 // pred_check_branch
      %226 = sbr.rel (0) target = $region141
    $region140: #{tpu_custom_call.1} parent=1 // pred_region
      %227 = dma.done [#allocation13], 16
    $region141: #{tpu_custom_call.1} parent=1 // pred_fallthru
      _
    // Predicated region
    $region142: #{tpu_custom_call.1} parent=1 // pred_check
      _
    $region143: #{tpu_custom_call.1} parent=1 // pred_check_branch
      %229 = sbr.rel (0) target = $region145
    $region144: #{tpu_custom_call.1} parent=1 // pred_region
      %230 = dma.done [#allocation16], 16
    $region145: #{tpu_custom_call.1} parent=1 // pred_fallthru
      _
    // Predicated region
    $region146: #{tpu_custom_call.1} parent=1 // pred_check
      _
    $region147: #{tpu_custom_call.1} parent=1 // pred_check_branch
      %232 = sbr.rel (0) target = $region149
    $region148: #{tpu_custom_call.1} parent=1 // pred_region
      %233 = dma.done [#allocation16], 16
    $region149: #{tpu_custom_call.1} parent=1 // pred_fallthru
      _
    // Predicated region
    $region150: #{tpu_custom_call.1} parent=1 // pred_check
      _
    $region151: #{tpu_custom_call.1} parent=1 // pred_check_branch
      %235 = sbr.rel (0) target = $region153
    $region152: #{tpu_custom_call.1} parent=1 // pred_region
      %236 = dma.done [#allocation19], 16
    $region153: #{tpu_custom_call.1} parent=1 // pred_fallthru
      _
    // Predicated region
    $region154: #{tpu_custom_call.1} parent=1 // pred_check
      _
    $region155: #{tpu_custom_call.1} parent=1 // pred_check_branch
      %238 = sbr.rel (0) target = $region157
    $region156: #{tpu_custom_call.1} parent=1 // pred_region
      %239 = dma.done [#allocation19], 16
    $region157: #{tpu_custom_call.1} parent=1 // pred_fallthru
      _
    // Predicated region
    $region158: #{tpu_custom_call.1} parent=1 // pred_check
      _
    $region159: #{tpu_custom_call.1} parent=1 // pred_check_branch
      %241 = sbr.rel (0) target = $region161
    $region160: #{tpu_custom_call.1} parent=1 // pred_region
      %242 = dma.done [#allocation22], 256
    $region161: #{tpu_custom_call.1} parent=1 // pred_fallthru
      _
    // Predicated region
    $region162: #{tpu_custom_call.1} parent=1 // pred_check
      _
    $region163: #{tpu_custom_call.1} parent=1 // pred_check_branch
      %244 = sbr.rel (0) target = $region165
    $region164: #{tpu_custom_call.1} parent=1 // pred_region
      %245 = dma.done [#allocation22], 16
    $region165: #{tpu_custom_call.1} parent=1 // pred_fallthru
      _
    %v247 = vld [vmem:[%s3] sm:$0xff]
    %v248 = vld [vmem:[%s3 + $0x8] sm:$0xff]
    %v249 = vld [vmem:[#allocation9] sm:$0xf]
    %v250 = vlaneseq
    %v251 = vand.u32 %v250, 127
    %252 = vset.pattern.permute.xlu0 0
    %253 = vperm.xlu0 %252, %v247
    %v254 = vpop.permute.xlu0 %253
    %255 = vset.pattern.permute.xlu0 0
    %256 = vperm.xlu0 %255, %v248
    %v257 = vpop.permute.xlu0 %256
    %vm258 = vcmp.eq.s32.totalorder %v254, %v251
    %vm259 = vcmp.eq.s32.totalorder %v257, %v251
    %v260 = vsel %vm258, 1.0, 0.0
    %v261 = vsel %vm259, 1.0, 0.0
    %v262 = vpack.c.bf16 %v261, %v260
    %vm263 = vcmask 64512
    %v265 = vsel %vm263, %v262, 0
    %vm267 = vcmask 1043456
    %v269 = vsel %vm267, %v249, 0
    %271 = vmatprep.subr.bf16.mxu0 0
    %272 = vmatpush1.bf16.msra.mxu0 %v269
    %273 = vmatprep.subr.bf16.mxu0 0
    %274 = vmatpush1.bf16.msra.mxu0 0
    %275 = vmatprep.subr.bf16.mxu0 0
    %276 = vmatpush1.bf16.msra.mxu0 0
    %277 = vmatprep.subr.bf16.mxu0 0
    %278 = vmatpush1.bf16.msra.mxu0 0
    %279 = vmatprep.subr.bf16.mxu0 0
    %280 = vmatpush1.bf16.msra.mxu0 0
    %281 = vmatprep.subr.bf16.mxu0 0
    %282 = vmatpush1.bf16.msra.mxu0 0
    %283 = vmatprep.subr.bf16.mxu0 0
    %284 = vmatpush1.bf16.msra.mxu0 0
    %285 = vmatprep.subr.bf16.mxu0 0
    %286 = vmatpush1.bf16.msra.mxu0 0
    %287 = vmatprep.subr.bf16.mxu0 0
    %288 = vmatpush1.bf16.msra.mxu0 0
    %289 = vmatprep.subr.bf16.mxu0 0
    %290 = vmatpush1.bf16.msra.mxu0 0
    %291 = vmatprep.subr.bf16.mxu0 0
    %292 = vmatpush1.bf16.msra.mxu0 0
    %293 = vmatprep.subr.bf16.mxu0 0
    %294 = vmatpush1.bf16.msra.mxu0 0
    %295 = vmatprep.subr.bf16.mxu0 0
    %296 = vmatpush1.bf16.msra.mxu0 0
    %297 = vmatprep.subr.bf16.mxu0 0
    %298 = vmatpush1.bf16.msra.mxu0 0
    %299 = vmatprep.subr.bf16.mxu0 0
    %300 = vmatpush1.bf16.msra.mxu0 0
    %301 = vmatprep.subr.bf16.mxu0 0
    %302 = vmatpush1.bf16.msra.mxu0 0
    %303 = vmatprep.mubr.bf16.mxu0 0
    %304 = vmatmul.mubr.bf16.gmra.mrb[0].mxu0 %v265
    %v305 = vpop.f32.mrb[0].mxu0
    %v306 = vadd.f32 0.0, %v305
    %v307 = vpop.f32.mrb[0].mxu0
    %v308 = vpop.f32.mrb[0].mxu0
    %v309 = vadd.f32 0.0, %v308
    %v310 = vpop.f32.mrb[0].mxu0
    %311 = vdwg.mxu0
    %v312 = vld [vmem:[%s4] sm:$0xff]
    %v313 = vld [vmem:[%s4 + $0x8] sm:$0xff]
    %v314 = vld [vmem:[#allocation11] sm:$0xf]
    %315 = vset.pattern.permute.xlu0 0
    %316 = vperm.xlu0 %315, %v312
    %v317 = vpop.permute.xlu0 %316
    %318 = vset.pattern.permute.xlu0 0
    %319 = vperm.xlu0 %318, %v313
    %v320 = vpop.permute.xlu0 %319
    %vm321 = vcmp.eq.s32.totalorder %v317, %v251
    %vm322 = vcmp.eq.s32.totalorder %v320, %v251
    %v323 = vsel %vm321, 1.0, 0.0
    %v324 = vsel %vm322, 1.0, 0.0
    %v325 = vpack.c.bf16 %v324, %v323
    %v327 = vsel %vm263, %v325, 0
    %v330 = vsel %vm267, %v314, 0
    %332 = vmatprep.subr.bf16.mxu0 0
    %333 = vmatpush1.bf16.msra.mxu0 %v330
    %334 = vmatprep.subr.bf16.mxu0 0
    %335 = vmatpush1.bf16.msra.mxu0 0
    %336 = vmatprep.subr.bf16.mxu0 0
    %337 = vmatpush1.bf16.msra.mxu0 0
    %338 = vmatprep.subr.bf16.mxu0 0
    %339 = vmatpush1.bf16.msra.mxu0 0
    %340 = vmatprep.subr.bf16.mxu0 0
    %341 = vmatpush1.bf16.msra.mxu0 0
    %342 = vmatprep.subr.bf16.mxu0 0
    %343 = vmatpush1.bf16.msra.mxu0 0
    %344 = vmatprep.subr.bf16.mxu0 0
    %345 = vmatpush1.bf16.msra.mxu0 0
    %346 = vmatprep.subr.bf16.mxu0 0
    %347 = vmatpush1.bf16.msra.mxu0 0
    %348 = vmatprep.subr.bf16.mxu0 0
    %349 = vmatpush1.bf16.msra.mxu0 0
    %350 = vmatprep.subr.bf16.mxu0 0
    %351 = vmatpush1.bf16.msra.mxu0 0
    %352 = vmatprep.subr.bf16.mxu0 0
    %353 = vmatpush1.bf16.msra.mxu0 0
    %354 = vmatprep.subr.bf16.mxu0 0
    %355 = vmatpush1.bf16.msra.mxu0 0
    %356 = vmatprep.subr.bf16.mxu0 0
    %357 = vmatpush1.bf16.msra.mxu0 0
    %358 = vmatprep.subr.bf16.mxu0 0
    %359 = vmatpush1.bf16.msra.mxu0 0
    %360 = vmatprep.subr.bf16.mxu0 0
    %361 = vmatpush1.bf16.msra.mxu0 0
    %362 = vmatprep.subr.bf16.mxu0 0
    %363 = vmatpush1.bf16.msra.mxu0 0
    %364 = vmatprep.mubr.bf16.mxu0 0
    %365 = vmatmul.mubr.bf16.gmra.mrb[0].mxu0 %v327
    %v366 = vpop.f32.mrb[0].mxu0
    %v367 = vadd.f32 0.0, %v366
    %v368 = vpop.f32.mrb[0].mxu0
    %v369 = vpop.f32.mrb[0].mxu0
    %v370 = vadd.f32 0.0, %v369
    %v371 = vpop.f32.mrb[0].mxu0
    %372 = vdwg.mxu0
    %v373 = vld [vmem:[%s5] sm:$0xff]
    %v374 = vld [vmem:[%s5 + $0x8] sm:$0xff]
    %v375 = vld [vmem:[#allocation12] sm:$0xf]
    %376 = vset.pattern.permute.xlu0 0
    %377 = vperm.xlu0 %376, %v373
    %v378 = vpop.permute.xlu0 %377
    %379 = vset.pattern.permute.xlu0 0
    %380 = vperm.xlu0 %379, %v374
    %v381 = vpop.permute.xlu0 %380
    %vm382 = vcmp.eq.s32.totalorder %v378, %v251
    %vm383 = vcmp.eq.s32.totalorder %v381, %v251
    %v384 = vsel %vm382, 1.0, 0.0
    %v385 = vsel %vm383, 1.0, 0.0
    %v386 = vpack.c.bf16 %v385, %v384
    %v388 = vsel %vm263, %v386, 0
    %v391 = vsel %vm267, %v375, 0
    %393 = vmatprep.subr.bf16.mxu0 0
    %394 = vmatpush1.bf16.msra.mxu0 %v391
    %395 = vmatprep.subr.bf16.mxu0 0
    %396 = vmatpush1.bf16.msra.mxu0 0
    %397 = vmatprep.subr.bf16.mxu0 0
    %398 = vmatpush1.bf16.msra.mxu0 0
    %399 = vmatprep.subr.bf16.mxu0 0
    %400 = vmatpush1.bf16.msra.mxu0 0
    %401 = vmatprep.subr.bf16.mxu0 0
    %402 = vmatpush1.bf16.msra.mxu0 0
    %403 = vmatprep.subr.bf16.mxu0 0
    %404 = vmatpush1.bf16.msra.mxu0 0
    %405 = vmatprep.subr.bf16.mxu0 0
    %406 = vmatpush1.bf16.msra.mxu0 0
    %407 = vmatprep.subr.bf16.mxu0 0
    %408 = vmatpush1.bf16.msra.mxu0 0
    %409 = vmatprep.subr.bf16.mxu0 0
    %410 = vmatpush1.bf16.msra.mxu0 0
    %411 = vmatprep.subr.bf16.mxu0 0
    %412 = vmatpush1.bf16.msra.mxu0 0
    %413 = vmatprep.subr.bf16.mxu0 0
    %414 = vmatpush1.bf16.msra.mxu0 0
    %415 = vmatprep.subr.bf16.mxu0 0
    %416 = vmatpush1.bf16.msra.mxu0 0
    %417 = vmatprep.subr.bf16.mxu0 0
    %418 = vmatpush1.bf16.msra.mxu0 0
    %419 = vmatprep.subr.bf16.mxu0 0
    %420 = vmatpush1.bf16.msra.mxu0 0
    %421 = vmatprep.subr.bf16.mxu0 0
    %422 = vmatpush1.bf16.msra.mxu0 0
    %423 = vmatprep.subr.bf16.mxu0 0
    %424 = vmatpush1.bf16.msra.mxu0 0
    %425 = vmatprep.mubr.bf16.mxu0 0
    %426 = vmatmul.mubr.bf16.gmra.mrb[0].mxu0 %v388
    %v427 = vpop.f32.mrb[0].mxu0
    %v428 = vadd.f32 0.0, %v427
    %v429 = vpop.f32.mrb[0].mxu0
    %v430 = vpop.f32.mrb[0].mxu0
    %v431 = vadd.f32 0.0, %v430
    %v432 = vpop.f32.mrb[0].mxu0
    %433 = vdwg.mxu0
    %v434 = vpack.c.bf16 %v431, %v428
    %v435 = vpack.c.bf16 %v309, %v306
    %v436 = vld [vmem:[#allocation3] sm:$0xf]
    %v437 = vld [vmem:[#allocation3 + $0x4] sm:$0xf]
    %v438 = vld [vmem:[%s10] sm:$0xf]
    %v439 = vld [vmem:[%s10 + $0x4] sm:$0xf]
    %v440 = vld [vmem:[%s10 + $0x8] sm:$0xf]
    %v441 = vld [vmem:[%s10 + $0xc] sm:$0xf]
    %v442 = vld [vmem:[%s12] sm:$0xf]
    %v443 = vld [vmem:[%s12 + $0x4] sm:$0xf]
    %v444 = vld [vmem:[%s12 + $0x8] sm:$0xf]
    %v445 = vld [vmem:[%s12 + $0xc] sm:$0xf]
    %v446 = vld [vmem:[#allocation14] sm:$0x1]
    %v447 = vld [vmem:[%s13] sm:$0x1]
    %v448 = vld [vmem:[%s9] sm:$0xf]
    %v449 = vld [vmem:[%s9 + $0x4] sm:$0xf]
    %v450 = vld [vmem:[%s9 + $0x8] sm:$0xf]
    %v451 = vld [vmem:[%s9 + $0xc] sm:$0xf]
    %v454 = vunpack.c.l.b16 %v436
    %v455 = vunpack.c.l.b16 %v437
    %v456 = vpack.c.b16 %v455, %v454
    %v461 = vunpack.c.l.b16 %v448
    %v462 = vunpack.c.l.b16 %v449
    %v463 = vunpack.c.l.b16 %v450
    %v464 = vunpack.c.l.b16 %v451
    %v465 = vpack.c.b16 %v462, %v461
    %v466 = vpack.c.b16 %v464, %v463
    %vm469 = vcmask 261120
    %v471 = vsel %vm469, %v456, 0
    %473 = vmatprep.subr.bf16.mxu0 0
    %474 = vmatpush1.bf16.msra.mxu0 %v465
    %475 = vmatprep.subr.bf16.mxu0 0
    %476 = vmatpush1.bf16.msra.mxu0 %v466
    %477 = vmatprep.subr.bf16.mxu0 0
    %478 = vmatpush1.bf16.msra.mxu0 0
    %479 = vmatprep.subr.bf16.mxu0 0
    %480 = vmatpush1.bf16.msra.mxu0 0
    %481 = vmatprep.subr.bf16.mxu0 0
    %482 = vmatpush1.bf16.msra.mxu0 0
    %483 = vmatprep.subr.bf16.mxu0 0
    %484 = vmatpush1.bf16.msra.mxu0 0
    %485 = vmatprep.subr.bf16.mxu0 0
    %486 = vmatpush1.bf16.msra.mxu0 0
    %487 = vmatprep.subr.bf16.mxu0 0
    %488 = vmatpush1.bf16.msra.mxu0 0
    %489 = vmatprep.subr.bf16.mxu0 0
    %490 = vmatpush1.bf16.msra.mxu0 0
    %491 = vmatprep.subr.bf16.mxu0 0
    %492 = vmatpush1.bf16.msra.mxu0 0
    %493 = vmatprep.subr.bf16.mxu0 0
    %494 = vmatpush1.bf16.msra.mxu0 0
    %495 = vmatprep.subr.bf16.mxu0 0
    %496 = vmatpush1.bf16.msra.mxu0 0
    %497 = vmatprep.subr.bf16.mxu0 0
    %498 = vmatpush1.bf16.msra.mxu0 0
    %499 = vmatprep.subr.bf16.mxu0 0
    %500 = vmatpush1.bf16.msra.mxu0 0
    %501 = vmatprep.subr.bf16.mxu0 0
    %502 = vmatpush1.bf16.msra.mxu0 0
    %503 = vmatprep.subr.bf16.mxu0 0
    %504 = vmatpush1.bf16.msra.mxu0 0
    %505 = vmatprep.mubr.bf16.mxu0 0
    %506 = vmatmul.mubr.bf16.gmra.mrb[0].mxu0 %v471
    %v507 = vpop.f32.mrb[0].mxu0
    %v508 = vadd.f32 0.0, %v507
    %v509 = vpop.f32.mrb[0].mxu0
    %v510 = vpop.f32.mrb[0].mxu0
    %v511 = vadd.f32 0.0, %v510
    %v512 = vpop.f32.mrb[0].mxu0
    %513 = vdwg.mxu0
    %v518 = vunpack.c.l.b16 %v438
    %v519 = vunpack.c.l.b16 %v439
    %v520 = vunpack.c.l.b16 %v440
    %v521 = vunpack.c.l.b16 %v441
    %v522 = vpack.c.b16 %v519, %v518
    %v523 = vpack.c.b16 %v521, %v520
    %v527 = vsel %vm469, %v434, 0
    %529 = vmatprep.subr.bf16.mxu0 0
    %530 = vmatpush1.bf16.msra.mxu0 %v522
    %531 = vmatprep.subr.bf16.mxu0 0
    %532 = vmatpush1.bf16.msra.mxu0 %v523
    %533 = vmatprep.subr.bf16.mxu0 0
    %534 = vmatpush1.bf16.msra.mxu0 0
    %535 = vmatprep.subr.bf16.mxu0 0
    %536 = vmatpush1.bf16.msra.mxu0 0
    %537 = vmatprep.subr.bf16.mxu0 0
    %538 = vmatpush1.bf16.msra.mxu0 0
    %539 = vmatprep.subr.bf16.mxu0 0
    %540 = vmatpush1.bf16.msra.mxu0 0
    %541 = vmatprep.subr.bf16.mxu0 0
    %542 = vmatpush1.bf16.msra.mxu0 0
    %543 = vmatprep.subr.bf16.mxu0 0
    %544 = vmatpush1.bf16.msra.mxu0 0
    %545 = vmatprep.subr.bf16.mxu0 0
    %546 = vmatpush1.bf16.msra.mxu0 0
    %547 = vmatprep.subr.bf16.mxu0 0
    %548 = vmatpush1.bf16.msra.mxu0 0
    %549 = vmatprep.subr.bf16.mxu0 0
    %550 = vmatpush1.bf16.msra.mxu0 0
    %551 = vmatprep.subr.bf16.mxu0 0
    %552 = vmatpush1.bf16.msra.mxu0 0
    %553 = vmatprep.subr.bf16.mxu0 0
    %554 = vmatpush1.bf16.msra.mxu0 0
    %555 = vmatprep.subr.bf16.mxu0 0
    %556 = vmatpush1.bf16.msra.mxu0 0
    %557 = vmatprep.subr.bf16.mxu0 0
    %558 = vmatpush1.bf16.msra.mxu0 0
    %559 = vmatprep.subr.bf16.mxu0 0
    %560 = vmatpush1.bf16.msra.mxu0 0
    %561 = vmatprep.mubr.bf16.mxu0 0
    %562 = vmatmul.mubr.bf16.gmra.mrb[0].mxu0 %v527
    %v563 = vpop.f32.mrb[0].mxu0
    %v564 = vadd.f32 0.0, %v563
    %v565 = vpop.f32.mrb[0].mxu0
    %v566 = vpop.f32.mrb[0].mxu0
    %v567 = vadd.f32 0.0, %v566
    %v568 = vpop.f32.mrb[0].mxu0
    %569 = vdwg.mxu0
    %v570 = vadd.f32 %v508, %v564
    %v571 = vadd.f32 %v511, %v567
    %v573 = vlaneseq
    %v574 = vshrl.u32 %v573, 7
    %v575 = vsub.s32 0, %v574
    %v576 = vrot.slane %v446, %v575
    %v578 = vadd.f32 %v570, %v576
    %v579 = vadd.f32 %v571, %v576
    %v580 = vmax.f32 %v578, 0.0
    %v581 = vmax.f32 %v579, 0.0
    %v582 = vpack.c.bf16 %v581, %v580
    %v584 = vlaneseq
    %v585 = vshrl.u32 %v584, 7
    %v586 = vsub.s32 0, %v585
    %v587 = vrot.slane %v447, %v586
    %v593 = vunpack.c.l.b16 %v442
    %v594 = vunpack.c.l.b16 %v443
    %v595 = vunpack.c.l.b16 %v444
    %v596 = vunpack.c.l.b16 %v445
    %v597 = vpack.c.b16 %v594, %v593
    %v598 = vpack.c.b16 %v596, %v595
    %v602 = vsel %vm469, %v582, 0
    %604 = vmatprep.subr.bf16.mxu0 0
    %605 = vmatpush1.bf16.msra.mxu0 %v597
    %606 = vmatprep.subr.bf16.mxu0 0
    %607 = vmatpush1.bf16.msra.mxu0 %v598
    %608 = vmatprep.subr.bf16.mxu0 0
    %609 = vmatpush1.bf16.msra.mxu0 0
    %610 = vmatprep.subr.bf16.mxu0 0
    %611 = vmatpush1.bf16.msra.mxu0 0
    %612 = vmatprep.subr.bf16.mxu0 0
    %613 = vmatpush1.bf16.msra.mxu0 0
    %614 = vmatprep.subr.bf16.mxu0 0
    %615 = vmatpush1.bf16.msra.mxu0 0
    %616 = vmatprep.subr.bf16.mxu0 0
    %617 = vmatpush1.bf16.msra.mxu0 0
    %618 = vmatprep.subr.bf16.mxu0 0
    %619 = vmatpush1.bf16.msra.mxu0 0
    %620 = vmatprep.subr.bf16.mxu0 0
    %621 = vmatpush1.bf16.msra.mxu0 0
    %622 = vmatprep.subr.bf16.mxu0 0
    %623 = vmatpush1.bf16.msra.mxu0 0
    %624 = vmatprep.subr.bf16.mxu0 0
    %625 = vmatpush1.bf16.msra.mxu0 0
    %626 = vmatprep.subr.bf16.mxu0 0
    %627 = vmatpush1.bf16.msra.mxu0 0
    %628 = vmatprep.subr.bf16.mxu0 0
    %629 = vmatpush1.bf16.msra.mxu0 0
    %630 = vmatprep.subr.bf16.mxu0 0
    %631 = vmatpush1.bf16.msra.mxu0 0
    %632 = vmatprep.subr.bf16.mxu0 0
    %633 = vmatpush1.bf16.msra.mxu0 0
    %634 = vmatprep.subr.bf16.mxu0 0
    %635 = vmatpush1.bf16.msra.mxu0 0
    %636 = vmatprep.mubr.bf16.mxu0 0
    %637 = vmatmul.mubr.bf16.gmra.mrb[0].mxu0 %v602
    %v638 = vpop.f32.mrb[0].mxu0
    %v639 = vadd.f32 %v587, %v638
    %v640 = vpop.f32.mrb[0].mxu0
    %v641 = vpop.f32.mrb[0].mxu0
    %v642 = vadd.f32 %v587, %v641
    %v643 = vpop.f32.mrb[0].mxu0
    %644 = vdwg.mxu0
    %v645 = vmul.f32 %v639, %v306
    %v646 = vmul.f32 %v642, %v309
    %v648 = vsel %vm469, %v435, 0
    %650 = vmatprep.subr.bf16.mxu0 0
    %651 = vmatpush1.bf16.msra.mxu0 %v522
    %652 = vmatprep.subr.bf16.mxu0 0
    %653 = vmatpush1.bf16.msra.mxu0 %v523
    %654 = vmatprep.subr.bf16.mxu0 0
    %655 = vmatpush1.bf16.msra.mxu0 0
    %656 = vmatprep.subr.bf16.mxu0 0
    %657 = vmatpush1.bf16.msra.mxu0 0
    %658 = vmatprep.subr.bf16.mxu0 0
    %659 = vmatpush1.bf16.msra.mxu0 0
    %660 = vmatprep.subr.bf16.mxu0 0
    %661 = vmatpush1.bf16.msra.mxu0 0
    %662 = vmatprep.subr.bf16.mxu0 0
    %663 = vmatpush1.bf16.msra.mxu0 0
    %664 = vmatprep.subr.bf16.mxu0 0
    %665 = vmatpush1.bf16.msra.mxu0 0
    %666 = vmatprep.subr.bf16.mxu0 0
    %667 = vmatpush1.bf16.msra.mxu0 0
    %668 = vmatprep.subr.bf16.mxu0 0
    %669 = vmatpush1.bf16.msra.mxu0 0
    %670 = vmatprep.subr.bf16.mxu0 0
    %671 = vmatpush1.bf16.msra.mxu0 0
    %672 = vmatprep.subr.bf16.mxu0 0
    %673 = vmatpush1.bf16.msra.mxu0 0
    %674 = vmatprep.subr.bf16.mxu0 0
    %675 = vmatpush1.bf16.msra.mxu0 0
    %676 = vmatprep.subr.bf16.mxu0 0
    %677 = vmatpush1.bf16.msra.mxu0 0
    %678 = vmatprep.subr.bf16.mxu0 0
    %679 = vmatpush1.bf16.msra.mxu0 0
    %680 = vmatprep.subr.bf16.mxu0 0
    %681 = vmatpush1.bf16.msra.mxu0 0
    %682 = vmatprep.mubr.bf16.mxu0 0
    %683 = vmatmul.mubr.bf16.gmra.mrb[0].mxu0 %v648
    %v684 = vpop.f32.mrb[0].mxu0
    %v685 = vadd.f32 0.0, %v684
    %v686 = vpop.f32.mrb[0].mxu0
    %v687 = vpop.f32.mrb[0].mxu0
    %v688 = vadd.f32 0.0, %v687
    %v689 = vpop.f32.mrb[0].mxu0
    %690 = vdwg.mxu0
    %v691 = vadd.f32 %v508, %v685
    %v692 = vadd.f32 %v511, %v688
    %v693 = vadd.f32 %v691, %v576
    %v694 = vadd.f32 %v692, %v576
    %v695 = vmax.f32 %v693, 0.0
    %v696 = vmax.f32 %v694, 0.0
    %v697 = vpack.c.bf16 %v696, %v695
    %v699 = vsel %vm469, %v697, 0
    %701 = vmatprep.subr.bf16.mxu0 0
    %702 = vmatpush1.bf16.msra.mxu0 %v597
    %703 = vmatprep.subr.bf16.mxu0 0
    %704 = vmatpush1.bf16.msra.mxu0 %v598
    %705 = vmatprep.subr.bf16.mxu0 0
    %706 = vmatpush1.bf16.msra.mxu0 0
    %707 = vmatprep.subr.bf16.mxu0 0
    %708 = vmatpush1.bf16.msra.mxu0 0
    %709 = vmatprep.subr.bf16.mxu0 0
    %710 = vmatpush1.bf16.msra.mxu0 0
    %711 = vmatprep.subr.bf16.mxu0 0
    %712 = vmatpush1.bf16.msra.mxu0 0
    %713 = vmatprep.subr.bf16.mxu0 0
    %714 = vmatpush1.bf16.msra.mxu0 0
    %715 = vmatprep.subr.bf16.mxu0 0
    %716 = vmatpush1.bf16.msra.mxu0 0
    %717 = vmatprep.subr.bf16.mxu0 0
    %718 = vmatpush1.bf16.msra.mxu0 0
    %719 = vmatprep.subr.bf16.mxu0 0
    %720 = vmatpush1.bf16.msra.mxu0 0
    %721 = vmatprep.subr.bf16.mxu0 0
    %722 = vmatpush1.bf16.msra.mxu0 0
    %723 = vmatprep.subr.bf16.mxu0 0
    %724 = vmatpush1.bf16.msra.mxu0 0
    %725 = vmatprep.subr.bf16.mxu0 0
    %726 = vmatpush1.bf16.msra.mxu0 0
    %727 = vmatprep.subr.bf16.mxu0 0
    %728 = vmatpush1.bf16.msra.mxu0 0
    %729 = vmatprep.subr.bf16.mxu0 0
    %730 = vmatpush1.bf16.msra.mxu0 0
    %731 = vmatprep.subr.bf16.mxu0 0
    %732 = vmatpush1.bf16.msra.mxu0 0
    %733 = vmatprep.mubr.bf16.mxu0 0
    %734 = vmatmul.mubr.bf16.gmra.mrb[0].mxu0 %v699
    %v735 = vpop.f32.mrb[0].mxu0
    %v736 = vadd.f32 %v587, %v735
    %v737 = vpop.f32.mrb[0].mxu0
    %v738 = vpop.f32.mrb[0].mxu0
    %v739 = vadd.f32 %v587, %v738
    %v740 = vpop.f32.mrb[0].mxu0
    %741 = vdwg.mxu0
    %v742 = vmul.f32 %v736, %v367
    %v743 = vmul.f32 %v739, %v370
    %v744 = vpack.c.bf16 %v743, %v742
    %v746 = vsel %vm469, %v744, 0
    %748 = vmatprep.subr.bf16.mxu0 0
    %749 = vmatpush1.bf16.msra.mxu0 %v522
    %750 = vmatprep.subr.bf16.mxu0 0
    %751 = vmatpush1.bf16.msra.mxu0 %v523
    %752 = vmatprep.subr.bf16.mxu0 0
    %753 = vmatpush1.bf16.msra.mxu0 0
    %754 = vmatprep.subr.bf16.mxu0 0
    %755 = vmatpush1.bf16.msra.mxu0 0
    %756 = vmatprep.subr.bf16.mxu0 0
    %757 = vmatpush1.bf16.msra.mxu0 0
    %758 = vmatprep.subr.bf16.mxu0 0
    %759 = vmatpush1.bf16.msra.mxu0 0
    %760 = vmatprep.subr.bf16.mxu0 0
    %761 = vmatpush1.bf16.msra.mxu0 0
    %762 = vmatprep.subr.bf16.mxu0 0
    %763 = vmatpush1.bf16.msra.mxu0 0
    %764 = vmatprep.subr.bf16.mxu0 0
    %765 = vmatpush1.bf16.msra.mxu0 0
    %766 = vmatprep.subr.bf16.mxu0 0
    %767 = vmatpush1.bf16.msra.mxu0 0
    %768 = vmatprep.subr.bf16.mxu0 0
    %769 = vmatpush1.bf16.msra.mxu0 0
    %770 = vmatprep.subr.bf16.mxu0 0
    %771 = vmatpush1.bf16.msra.mxu0 0
    %772 = vmatprep.subr.bf16.mxu0 0
    %773 = vmatpush1.bf16.msra.mxu0 0
    %774 = vmatprep.subr.bf16.mxu0 0
    %775 = vmatpush1.bf16.msra.mxu0 0
    %776 = vmatprep.subr.bf16.mxu0 0
    %777 = vmatpush1.bf16.msra.mxu0 0
    %778 = vmatprep.subr.bf16.mxu0 0
    %779 = vmatpush1.bf16.msra.mxu0 0
    %780 = vmatprep.mubr.bf16.mxu0 0
    %781 = vmatmul.mubr.bf16.gmra.mrb[0].mxu0 %v746
    %v782 = vpop.f32.mrb[0].mxu0
    %v783 = vadd.f32 0.0, %v782
    %v784 = vpop.f32.mrb[0].mxu0
    %v785 = vpop.f32.mrb[0].mxu0
    %v786 = vadd.f32 0.0, %v785
    %v787 = vpop.f32.mrb[0].mxu0
    %788 = vdwg.mxu0
    %v789 = vadd.f32 %v508, %v783
    %v790 = vadd.f32 %v511, %v786
    %v791 = vadd.f32 %v789, %v576
    %v792 = vadd.f32 %v790, %v576
    %v793 = vmax.f32 %v791, 0.0
    %v794 = vmax.f32 %v792, 0.0
    %v795 = vpack.c.bf16 %v794, %v793
    %v797 = vsel %vm469, %v795, 0
    %799 = vmatprep.subr.bf16.mxu0 0
    %800 = vmatpush1.bf16.msra.mxu0 %v597
    %801 = vmatprep.subr.bf16.mxu0 0
    %802 = vmatpush1.bf16.msra.mxu0 %v598
    %803 = vmatprep.subr.bf16.mxu0 0
    %804 = vmatpush1.bf16.msra.mxu0 0
    %805 = vmatprep.subr.bf16.mxu0 0
    %806 = vmatpush1.bf16.msra.mxu0 0
    %807 = vmatprep.subr.bf16.mxu0 0
    %808 = vmatpush1.bf16.msra.mxu0 0
    %809 = vmatprep.subr.bf16.mxu0 0
    %810 = vmatpush1.bf16.msra.mxu0 0
    %811 = vmatprep.subr.bf16.mxu0 0
    %812 = vmatpush1.bf16.msra.mxu0 0
    %813 = vmatprep.subr.bf16.mxu0 0
    %814 = vmatpush1.bf16.msra.mxu0 0
    %815 = vmatprep.subr.bf16.mxu0 0
    %816 = vmatpush1.bf16.msra.mxu0 0
    %817 = vmatprep.subr.bf16.mxu0 0
    %818 = vmatpush1.bf16.msra.mxu0 0
    %819 = vmatprep.subr.bf16.mxu0 0
    %820 = vmatpush1.bf16.msra.mxu0 0
    %821 = vmatprep.subr.bf16.mxu0 0
    %822 = vmatpush1.bf16.msra.mxu0 0
    %823 = vmatprep.subr.bf16.mxu0 0
    %824 = vmatpush1.bf16.msra.mxu0 0
    %825 = vmatprep.subr.bf16.mxu0 0
    %826 = vmatpush1.bf16.msra.mxu0 0
    %827 = vmatprep.subr.bf16.mxu0 0
    %828 = vmatpush1.bf16.msra.mxu0 0
    %829 = vmatprep.subr.bf16.mxu0 0
    %830 = vmatpush1.bf16.msra.mxu0 0
    %831 = vmatprep.mubr.bf16.mxu0 0
    %832 = vmatmul.mubr.bf16.gmra.mrb[0].mxu0 %v797
    %v833 = vpop.f32.mrb[0].mxu0
    %v834 = vadd.f32 %v587, %v833
    %v835 = vpop.f32.mrb[0].mxu0
    %v836 = vpop.f32.mrb[0].mxu0
    %v837 = vadd.f32 %v587, %v836
    %v838 = vpop.f32.mrb[0].mxu0
    %839 = vdwg.mxu0
    %v840 = vld [vmem:[#allocation8] sm:$0x3]
    %vm841 = vcmp.gt.s32.totalorder %v840, 0
    %v842 = vsel %vm841, 1, 0
    %v843 = vcvt.s32.f32 %v842
    %v844 = vld [vmem:[%s14] sm:$0xf]
    %v845 = vld [vmem:[%s14 + $0x4] sm:$0xf]
    %v846 = vld [vmem:[%s14 + $0x8] sm:$0xf]
    %v847 = vld [vmem:[%s14 + $0xc] sm:$0xf]
    %v848 = vld [vmem:[#allocation15] sm:$0x1]
    %v849 = vld [vmem:[#allocation17] sm:$0x1]
    %v850 = vld [vmem:[#allocation2] sm:$0x1]
    %v851 = vld [vmem:[%s19] sm:$0xf]
    %v852 = vld [vmem:[%s19 + $0x4] sm:$0xf]
    %v853 = vld [vmem:[%s19 + $0x8] sm:$0xf]
    %v854 = vld [vmem:[%s19 + $0xc] sm:$0xf]
    %v855 = vld [vmem:[#allocation18] sm:$0x1]
    %v856 = vld [vmem:[#allocation6] sm:$0x1]
    %v857 = vld [vmem:[%s15] sm:$0xf]
    %v858 = vld [vmem:[%s15 + $0x4] sm:$0xf]
    %v859 = vld [vmem:[%s15 + $0x8] sm:$0xf]
    %v860 = vld [vmem:[%s15 + $0xc] sm:$0xf]
    %v865 = vunpack.c.l.b16 %v857
    %v866 = vunpack.c.l.b16 %v858
    %v867 = vunpack.c.l.b16 %v859
    %v868 = vunpack.c.l.b16 %v860
    %v869 = vpack.c.b16 %v866, %v865
    %v870 = vpack.c.b16 %v868, %v867
    %v874 = vsel %vm469, %v856, 0
    %876 = vmatprep.subr.bf16.mxu0 0
    %877 = vmatpush1.bf16.msra.mxu0 %v869
    %878 = vmatprep.subr.bf16.mxu0 0
    %879 = vmatpush1.bf16.msra.mxu0 %v870
    %880 = vmatprep.subr.bf16.mxu0 0
    %881 = vmatpush1.bf16.msra.mxu0 0
    %882 = vmatprep.subr.bf16.mxu0 0
    %883 = vmatpush1.bf16.msra.mxu0 0
    %884 = vmatprep.subr.bf16.mxu0 0
    %885 = vmatpush1.bf16.msra.mxu0 0
    %886 = vmatprep.subr.bf16.mxu0 0
    %887 = vmatpush1.bf16.msra.mxu0 0
    %888 = vmatprep.subr.bf16.mxu0 0
    %889 = vmatpush1.bf16.msra.mxu0 0
    %890 = vmatprep.subr.bf16.mxu0 0
    %891 = vmatpush1.bf16.msra.mxu0 0
    %892 = vmatprep.subr.bf16.mxu0 0
    %893 = vmatpush1.bf16.msra.mxu0 0
    %894 = vmatprep.subr.bf16.mxu0 0
    %895 = vmatpush1.bf16.msra.mxu0 0
    %896 = vmatprep.subr.bf16.mxu0 0
    %897 = vmatpush1.bf16.msra.mxu0 0
    %898 = vmatprep.subr.bf16.mxu0 0
    %899 = vmatpush1.bf16.msra.mxu0 0
    %900 = vmatprep.subr.bf16.mxu0 0
    %901 = vmatpush1.bf16.msra.mxu0 0
    %902 = vmatprep.subr.bf16.mxu0 0
    %903 = vmatpush1.bf16.msra.mxu0 0
    %904 = vmatprep.subr.bf16.mxu0 0
    %905 = vmatpush1.bf16.msra.mxu0 0
    %906 = vmatprep.subr.bf16.mxu0 0
    %907 = vmatpush1.bf16.msra.mxu0 0
    %908 = vmatprep.mubr.bf16.mxu0 0
    %909 = vmatmul.mubr.bf16.gmra.mrb[0].mxu0 %v874
    %v910 = vpop.f32.mrb[0].mxu0
    %v911 = vadd.f32 0.0, %v910
    %v912 = vpop.f32.mrb[0].mxu0
    %v913 = vpop.f32.mrb[0].mxu0
    %v914 = vpop.f32.mrb[0].mxu0
    %915 = vdwg.mxu0
    %v916 = vpack.c.bf16 %v646, %v645
    %v918 = vlaneseq
    %v919 = vshrl.u32 %v918, 7
    %v920 = vsub.s32 0, %v919
    %v921 = vrot.slane %v848, %v920
    %v927 = vunpack.c.l.b16 %v844
    %v928 = vunpack.c.l.b16 %v845
    %v929 = vunpack.c.l.b16 %v846
    %v930 = vunpack.c.l.b16 %v847
    %v931 = vpack.c.b16 %v928, %v927
    %v932 = vpack.c.b16 %v930, %v929
    %v936 = vsel %vm469, %v916, 0
    %938 = vmatprep.subr.bf16.mxu0 0
    %939 = vmatpush1.bf16.msra.mxu0 %v931
    %940 = vmatprep.subr.bf16.mxu0 0
    %941 = vmatpush1.bf16.msra.mxu0 %v932
    %942 = vmatprep.subr.bf16.mxu0 0
    %943 = vmatpush1.bf16.msra.mxu0 0
    %944 = vmatprep.subr.bf16.mxu0 0
    %945 = vmatpush1.bf16.msra.mxu0 0
    %946 = vmatprep.subr.bf16.mxu0 0
    %947 = vmatpush1.bf16.msra.mxu0 0
    %948 = vmatprep.subr.bf16.mxu0 0
    %949 = vmatpush1.bf16.msra.mxu0 0
    %950 = vmatprep.subr.bf16.mxu0 0
    %951 = vmatpush1.bf16.msra.mxu0 0
    %952 = vmatprep.subr.bf16.mxu0 0
    %953 = vmatpush1.bf16.msra.mxu0 0
    %954 = vmatprep.subr.bf16.mxu0 0
    %955 = vmatpush1.bf16.msra.mxu0 0
    %956 = vmatprep.subr.bf16.mxu0 0
    %957 = vmatpush1.bf16.msra.mxu0 0
    %958 = vmatprep.subr.bf16.mxu0 0
    %959 = vmatpush1.bf16.msra.mxu0 0
    %960 = vmatprep.subr.bf16.mxu0 0
    %961 = vmatpush1.bf16.msra.mxu0 0
    %962 = vmatprep.subr.bf16.mxu0 0
    %963 = vmatpush1.bf16.msra.mxu0 0
    %964 = vmatprep.subr.bf16.mxu0 0
    %965 = vmatpush1.bf16.msra.mxu0 0
    %966 = vmatprep.subr.bf16.mxu0 0
    %967 = vmatpush1.bf16.msra.mxu0 0
    %968 = vmatprep.subr.bf16.mxu0 0
    %969 = vmatpush1.bf16.msra.mxu0 0
    %970 = vmatprep.mubr.bf16.mxu0 0
    %971 = vmatmul.mubr.bf16.gmra.mrb[0].mxu0 %v936
    %v972 = vpop.f32.mrb[0].mxu0
    %v973 = vadd.f32 %v921, %v972
    %v974 = vpop.f32.mrb[0].mxu0
    %v975 = vpop.f32.mrb[0].mxu0
    %v976 = vadd.f32 %v921, %v975
    %v977 = vpop.f32.mrb[0].mxu0
    %978 = vdwg.mxu0
    %v981 = vunpack.c.l.s4 1966171168
    %v982 = vunpack.c.0.s8 %v981
    %v983 = vlaneseq
    %v984 = vshrl.u32 %v983, 7
    %v985 = vsub.s32 %v982, %v984
    %v986 = vrot.slane %v911, %v985
    %v987 = vcombine.high %v986, %v986
    %v989 = vunpack.c.l.s4 1966171168
    %v990 = vunpack.c.0.s8 %v989
    %v991 = vlaneseq
    %v992 = vshrl.u32 %v991, 7
    %v993 = vsub.s32 %v990, %v992
    %v994 = vrot.slane %v986, %v993
    %v996 = vunpack.c.l.s4 1966171168
    %v997 = vunpack.c.0.s8 %v996
    %v998 = vlaneseq
    %v999 = vshrl.u32 %v998, 7
    %v1000 = vsub.s32 %v997, %v999
    %v1001 = vrot.slane %v987, %v1000
    %v1002 = vlaneseq
    %v1003 = vshrl.u32 %v1002, 7
    %v1004 = vsub.s32 0, %v1003
    %v1005 = vrot.slane %v994, %v1004
    %v1006 = vlaneseq
    %v1007 = vshrl.u32 %v1006, 7
    %v1008 = vsub.s32 0, %v1007
    %v1009 = vrot.slane %v1001, %v1008
    %v1012 = vadd.f32 %v973, %v1005
    %v1013 = vadd.f32 %v976, %v1009
    %v1014 = vmax.f32 %v1012, 0.0
    %v1015 = vmax.f32 %v1013, 0.0
    %v1016 = vunpack.c.l.bf16 %v849
    %v1017 = vlaneseq
    %v1018 = vshrl.u32 %v1017, 7
    %v1019 = vsub.s32 0, %v1018
    %v1020 = vrot.slane %v1016, %v1019
    %v1021 = vmul.f32 %v1014, %v1020
    %v1022 = vmul.f32 %v1015, %v1020
    %v1023 = vsel %vm469, %v1021, 0.0
    %1024 = vadd.xlane.f32.xlu0 %v1023
    %v1025 = vpop.xlane.xlu0 %1024
    %v1026 = vsel %vm469, %v1022, 0.0
    %1027 = vadd.xlane.f32.xlu0 %v1026
    %v1028 = vpop.xlane.xlu0 %1027
    %v1030 = vlaneseq
    %v1031 = vshrl.u32 %v1030, 7
    %v1032 = vsub.s32 0, %v1031
    %v1033 = vrot.slane %v850, %v1032
    %1034 = vset.pattern.permute.xlu0 0
    %1035 = vperm.xlu0 %1034, %v1033
    %v1036 = vpop.permute.xlu0 %1035
    %v1038 = vadd.f32 %v1025, %v1036
    %v1039 = vadd.f32 %v1028, %v1036
    %vm1040 = vcmp.gt.f32.partialorder %v843, 0.0
    %v1043 = vlaneseq
    %v1044 = vshrl.u32 %v1043, 7
    %v1045 = vsub.s32 %v251, %v1044
    %v1046 = vrot.slane %v1038, %v1045
    %v1047 = vlaneseq
    %v1048 = vshrl.u32 %v1047, 7
    %v1049 = vsub.s32 %v251, %v1048
    %v1050 = vrot.slane %v1039, %v1049
    %vm1051 = vcmask 1041409
    %v1052 = vsel %vm1051, %v1050, %v1046
    %v1054 = vsel %vm1040, %v1052, -1e+30
    %vm1055 = vcmask 58368
    %v1056 = vsel %vm1055, %v1054, -inf
    %1057 = vmax.xlane.f32.xlu0 %v1056
    %v1058 = vpop.xlane.xlu0 %1057
    %v1059 = vmax.f32 %v1058, 0.0
    %v1060 = vsub.f32 %v1054, %v1059
    %v1061 = vmul.f32 %v1060, 1.442695
    %v1062 = vpow.pop %v1061
    %v1063 = vsel %vm1055, %v1062, 0.0
    %1064 = vadd.xlane.f32.xlu0 %v1063
    %v1065 = vpop.xlane.xlu0 %1064
    %v1066 = vsub.f32 0.0, %v1059
    %v1067 = vmul.f32 %v1066, 1.442695
    %v1068 = vpow.pop %v1067
    %v1069 = vmul.f32 %v1068, 1e-10
    %v1070 = vadd.f32 %v1065, %v1069
    %v1071 = vrcp.pop %v1070
    %v1072 = vmul.f32 %v1062, %v1071
    %v1073 = vlaneseq
    %v1074 = vshrl.u32 %v1073, 7
    %v1075 = vsub.s32 0, %v1074
    %v1076 = vrot.slane %v1072, %v1075
    %1078 = vbcast.lane.b32.xlu0 %v1076, 256
    %v1079 = vpop.permute.xlu0 %1078
    %v1080 = vlaneseq
    %v1081 = vshrl.u32 %v1080, 7
    %v1082 = vsub.s32 1, %v1081
    %v1083 = vrot.slane %v1072, %v1082
    %1085 = vbcast.lane.b32.xlu0 %v1083, 256
    %v1086 = vpop.permute.xlu0 %1085
    %v1087 = vmul.f32 %v1079, %v645
    %v1088 = vmul.f32 %v1086, %v646
    %v1089 = vsel %vm469, %v1087, 0.0
    %v1090 = vrot.slane %v1089, 4
    %v1091 = vadd.f32 %v1089, %v1090
    %v1092 = vrot.slane %v1091, 2
    %v1093 = vadd.f32 %v1091, %v1092
    %v1094 = vrot.slane %v1093, 1
    %v1095 = vadd.f32 %v1093, %v1094
    %v1096 = vsel %vm469, %v1088, 0.0
    %v1097 = vrot.slane %v1096, 4
    %v1098 = vadd.f32 %v1096, %v1097
    %v1099 = vrot.slane %v1098, 2
    %v1100 = vadd.f32 %v1098, %v1099
    %v1101 = vrot.slane %v1100, 1
    %v1102 = vadd.f32 %v1100, %v1101
    %v1103 = vpack.c.bf16 %v1095, %v1095
    %v1104 = vpack.c.bf16 %v1102, %v1102
    %v1106 = vlaneseq
    %v1107 = vshrl.u32 %v1106, 7
    %v1108 = vsub.s32 0, %v1107
    %v1109 = vrot.slane %v855, %v1108
    %v1113 = vunpack.c.l.b16 %v1103
    %v1114 = vunpack.c.l.b16 %v1104
    %v1115 = vsel %vm1051, %v1114, %v1113
    %v1116 = vpack.c.b16 %v1115, %v1115
    %v1121 = vunpack.c.l.b16 %v851
    %v1122 = vunpack.c.l.b16 %v852
    %v1123 = vunpack.c.l.b16 %v853
    %v1124 = vunpack.c.l.b16 %v854
    %v1125 = vpack.c.b16 %v1122, %v1121
    %v1126 = vpack.c.b16 %v1124, %v1123
    %v1130 = vsel %vm469, %v1116, 0
    %1132 = vmatprep.subr.bf16.mxu0 0
    %1133 = vmatpush1.bf16.msra.mxu0 %v1125
    %1134 = vmatprep.subr.bf16.mxu0 0
    %1135 = vmatpush1.bf16.msra.mxu0 %v1126
    %1136 = vmatprep.subr.bf16.mxu0 0
    %1137 = vmatpush1.bf16.msra.mxu0 0
    %1138 = vmatprep.subr.bf16.mxu0 0
    %1139 = vmatpush1.bf16.msra.mxu0 0
    %1140 = vmatprep.subr.bf16.mxu0 0
    %1141 = vmatpush1.bf16.msra.mxu0 0
    %1142 = vmatprep.subr.bf16.mxu0 0
    %1143 = vmatpush1.bf16.msra.mxu0 0
    %1144 = vmatprep.subr.bf16.mxu0 0
    %1145 = vmatpush1.bf16.msra.mxu0 0
    %1146 = vmatprep.subr.bf16.mxu0 0
    %1147 = vmatpush1.bf16.msra.mxu0 0
    %1148 = vmatprep.subr.bf16.mxu0 0
    %1149 = vmatpush1.bf16.msra.mxu0 0
    %1150 = vmatprep.subr.bf16.mxu0 0
    %1151 = vmatpush1.bf16.msra.mxu0 0
    %1152 = vmatprep.subr.bf16.mxu0 0
    %1153 = vmatpush1.bf16.msra.mxu0 0
    %1154 = vmatprep.subr.bf16.mxu0 0
    %1155 = vmatpush1.bf16.msra.mxu0 0
    %1156 = vmatprep.subr.bf16.mxu0 0
    %1157 = vmatpush1.bf16.msra.mxu0 0
    %1158 = vmatprep.subr.bf16.mxu0 0
    %1159 = vmatpush1.bf16.msra.mxu0 0
    %1160 = vmatprep.subr.bf16.mxu0 0
    %1161 = vmatpush1.bf16.msra.mxu0 0
    %1162 = vmatprep.subr.bf16.mxu0 0
    %1163 = vmatpush1.bf16.msra.mxu0 0
    %1164 = vmatprep.mubr.bf16.mxu0 0
    %1165 = vmatmul.mubr.bf16.gmra.mrb[0].mxu0 %v1130
    %v1166 = vpop.f32.mrb[0].mxu0
    %v1167 = vadd.f32 %v1109, %v1166
    %v1168 = vpop.f32.mrb[0].mxu0
    %v1169 = vpop.f32.mrb[0].mxu0
    %v1170 = vpop.f32.mrb[0].mxu0
    %1171 = vdwg.mxu0
    %v1172 = vmax.f32 %v1167, 0.0
    %v1173 = vpack.c.bf16 %v837, %v834
    %v1175 = vsel %vm469, %v1173, 0
    %1177 = vmatprep.subr.bf16.mxu0 0
    %1178 = vmatpush1.bf16.msra.mxu0 %v931
    %1179 = vmatprep.subr.bf16.mxu0 0
    %1180 = vmatpush1.bf16.msra.mxu0 %v932
    %1181 = vmatprep.subr.bf16.mxu0 0
    %1182 = vmatpush1.bf16.msra.mxu0 0
    %1183 = vmatprep.subr.bf16.mxu0 0
    %1184 = vmatpush1.bf16.msra.mxu0 0
    %1185 = vmatprep.subr.bf16.mxu0 0
    %1186 = vmatpush1.bf16.msra.mxu0 0
    %1187 = vmatprep.subr.bf16.mxu0 0
    %1188 = vmatpush1.bf16.msra.mxu0 0
    %1189 = vmatprep.subr.bf16.mxu0 0
    %1190 = vmatpush1.bf16.msra.mxu0 0
    %1191 = vmatprep.subr.bf16.mxu0 0
    %1192 = vmatpush1.bf16.msra.mxu0 0
    %1193 = vmatprep.subr.bf16.mxu0 0
    %1194 = vmatpush1.bf16.msra.mxu0 0
    %1195 = vmatprep.subr.bf16.mxu0 0
    %1196 = vmatpush1.bf16.msra.mxu0 0
    %1197 = vmatprep.subr.bf16.mxu0 0
    %1198 = vmatpush1.bf16.msra.mxu0 0
    %1199 = vmatprep.subr.bf16.mxu0 0
    %1200 = vmatpush1.bf16.msra.mxu0 0
    %1201 = vmatprep.subr.bf16.mxu0 0
    %1202 = vmatpush1.bf16.msra.mxu0 0
    %1203 = vmatprep.subr.bf16.mxu0 0
    %1204 = vmatpush1.bf16.msra.mxu0 0
    %1205 = vmatprep.subr.bf16.mxu0 0
    %1206 = vmatpush1.bf16.msra.mxu0 0
    %1207 = vmatprep.subr.bf16.mxu0 0
    %1208 = vmatpush1.bf16.msra.mxu0 0
    %1209 = vmatprep.mubr.bf16.mxu0 0
    %1210 = vmatmul.mubr.bf16.gmra.mrb[0].mxu0 %v1175
    %v1211 = vpop.f32.mrb[0].mxu0
    %v1212 = vadd.f32 %v921, %v1211
    %v1213 = vpop.f32.mrb[0].mxu0
    %v1214 = vpop.f32.mrb[0].mxu0
    %v1215 = vadd.f32 %v921, %v1214
    %v1216 = vpop.f32.mrb[0].mxu0
    %1217 = vdwg.mxu0
    %v1218 = vadd.f32 %v1212, %v1005
    %v1219 = vadd.f32 %v1215, %v1009
    %v1220 = vmax.f32 %v1218, 0.0
    %v1221 = vmax.f32 %v1219, 0.0
    %v1222 = vmul.f32 %v1220, %v1020
    %v1223 = vmul.f32 %v1221, %v1020
    %v1224 = vsel %vm469, %v1222, 0.0
    %1225 = vadd.xlane.f32.xlu0 %v1224
    %v1226 = vpop.xlane.xlu0 %1225
    %v1227 = vsel %vm469, %v1223, 0.0
    %1228 = vadd.xlane.f32.xlu0 %v1227
    %v1229 = vpop.xlane.xlu0 %1228
    %v1230 = vadd.f32 %v1226, %v1036
    %v1231 = vadd.f32 %v1229, %v1036
    %v1234 = vlaneseq
    %v1235 = vshrl.u32 %v1234, 7
    %v1236 = vsub.s32 %v251, %v1235
    %v1237 = vrot.slane %v1230, %v1236
    %v1238 = vlaneseq
    %v1239 = vshrl.u32 %v1238, 7
    %v1240 = vsub.s32 %v251, %v1239
    %v1241 = vrot.slane %v1231, %v1240
    %v1242 = vsel %vm1051, %v1241, %v1237
    %v1244 = vsel %vm1040, %v1242, -1e+30
    %v1245 = vsel %vm1055, %v1244, -inf
    %1246 = vmax.xlane.f32.xlu0 %v1245
    %v1247 = vpop.xlane.xlu0 %1246
    %v1248 = vmax.f32 %v1247, 0.0
    %v1249 = vsub.f32 %v1244, %v1248
    %v1250 = vmul.f32 %v1249, 1.442695
    %v1251 = vpow.pop %v1250
    %v1252 = vsel %vm1055, %v1251, 0.0
    %1253 = vadd.xlane.f32.xlu0 %v1252
    %v1254 = vpop.xlane.xlu0 %1253
    %v1255 = vsub.f32 0.0, %v1248
    %v1256 = vmul.f32 %v1255, 1.442695
    %v1257 = vpow.pop %v1256
    %v1258 = vmul.f32 %v1257, 1e-10
    %v1259 = vadd.f32 %v1254, %v1258
    %v1260 = vrcp.pop %v1259
    %v1261 = vmul.f32 %v1251, %v1260
    %v1262 = vlaneseq
    %v1263 = vshrl.u32 %v1262, 7
    %v1264 = vsub.s32 0, %v1263
    %v1265 = vrot.slane %v1261, %v1264
    %1267 = vbcast.lane.b32.xlu0 %v1265, 256
    %v1268 = vpop.permute.xlu0 %1267
    %v1269 = vlaneseq
    %v1270 = vshrl.u32 %v1269, 7
    %v1271 = vsub.s32 1, %v1270
    %v1272 = vrot.slane %v1261, %v1271
    %1274 = vbcast.lane.b32.xlu0 %v1272, 256
    %v1275 = vpop.permute.xlu0 %1274
    %v1276 = vmul.f32 %v1268, %v834
    %v1277 = vmul.f32 %v1275, %v837
    %v1278 = vsel %vm469, %v1276, 0.0
    %v1279 = vrot.slane %v1278, 4
    %v1280 = vadd.f32 %v1278, %v1279
    %v1281 = vrot.slane %v1280, 2
    %v1282 = vadd.f32 %v1280, %v1281
    %v1283 = vrot.slane %v1282, 1
    %v1284 = vadd.f32 %v1282, %v1283
    %v1285 = vsel %vm469, %v1277, 0.0
    %v1286 = vrot.slane %v1285, 4
    %v1287 = vadd.f32 %v1285, %v1286
    %v1288 = vrot.slane %v1287, 2
    %v1289 = vadd.f32 %v1287, %v1288
    %v1290 = vrot.slane %v1289, 1
    %v1291 = vadd.f32 %v1289, %v1290
    %v1292 = vpack.c.bf16 %v1284, %v1284
    %v1293 = vpack.c.bf16 %v1291, %v1291
    %v1296 = vunpack.c.l.b16 %v1292
    %v1297 = vunpack.c.l.b16 %v1293
    %v1298 = vsel %vm1051, %v1297, %v1296
    %v1299 = vpack.c.b16 %v1298, %v1298
    %v1301 = vsel %vm469, %v1299, 0
    %1303 = vmatprep.subr.bf16.mxu0 0
    %1304 = vmatpush1.bf16.msra.mxu0 %v1125
    %1305 = vmatprep.subr.bf16.mxu0 0
    %1306 = vmatpush1.bf16.msra.mxu0 %v1126
    %1307 = vmatprep.subr.bf16.mxu0 0
    %1308 = vmatpush1.bf16.msra.mxu0 0
    %1309 = vmatprep.subr.bf16.mxu0 0
    %1310 = vmatpush1.bf16.msra.mxu0 0
    %1311 = vmatprep.subr.bf16.mxu0 0
    %1312 = vmatpush1.bf16.msra.mxu0 0
    %1313 = vmatprep.subr.bf16.mxu0 0
    %1314 = vmatpush1.bf16.msra.mxu0 0
    %1315 = vmatprep.subr.bf16.mxu0 0
    %1316 = vmatpush1.bf16.msra.mxu0 0
    %1317 = vmatprep.subr.bf16.mxu0 0
    %1318 = vmatpush1.bf16.msra.mxu0 0
    %1319 = vmatprep.subr.bf16.mxu0 0
    %1320 = vmatpush1.bf16.msra.mxu0 0
    %1321 = vmatprep.subr.bf16.mxu0 0
    %1322 = vmatpush1.bf16.msra.mxu0 0
    %1323 = vmatprep.subr.bf16.mxu0 0
    %1324 = vmatpush1.bf16.msra.mxu0 0
    %1325 = vmatprep.subr.bf16.mxu0 0
    %1326 = vmatpush1.bf16.msra.mxu0 0
    %1327 = vmatprep.subr.bf16.mxu0 0
    %1328 = vmatpush1.bf16.msra.mxu0 0
    %1329 = vmatprep.subr.bf16.mxu0 0
    %1330 = vmatpush1.bf16.msra.mxu0 0
    %1331 = vmatprep.subr.bf16.mxu0 0
    %1332 = vmatpush1.bf16.msra.mxu0 0
    %1333 = vmatprep.subr.bf16.mxu0 0
    %1334 = vmatpush1.bf16.msra.mxu0 0
    %1335 = vmatprep.mubr.bf16.mxu0 0
    %1336 = vmatmul.mubr.bf16.gmra.mrb[0].mxu0 %v1301
    %v1337 = vpop.f32.mrb[0].mxu0
    %v1338 = vadd.f32 %v1109, %v1337
    %v1339 = vpop.f32.mrb[0].mxu0
    %v1340 = vpop.f32.mrb[0].mxu0
    %v1341 = vpop.f32.mrb[0].mxu0
    %1342 = vdwg.mxu0
    %v1343 = vmax.f32 %v1338, 0.0
    %v1344 = vpack.c.bf16 %v1172, %v1172
    %v1345 = vld [vmem:[%s21] sm:$0xf]
    %v1346 = vld [vmem:[%s21 + $0x4] sm:$0xf]
    %v1347 = vld [vmem:[%s21 + $0x8] sm:$0xf]
    %v1348 = vld [vmem:[%s21 + $0xc] sm:$0xf]
    %v1349 = vpack.c.bf16 %v1343, %v1343
    %v1350 = vld [vmem:[%s22] sm:$0xf]
    %v1351 = vld [vmem:[%s22 + $0x4] sm:$0xf]
    %v1352 = vld [vmem:[%s22 + $0x8] sm:$0xf]
    %v1353 = vld [vmem:[%s22 + $0xc] sm:$0xf]
    %v1358 = vunpack.c.l.b16 %v1350
    %v1359 = vunpack.c.l.b16 %v1351
    %v1360 = vunpack.c.l.b16 %v1352
    %v1361 = vunpack.c.l.b16 %v1353
    %v1362 = vpack.c.b16 %v1359, %v1358
    %v1363 = vpack.c.b16 %v1361, %v1360
    %v1367 = vsel %vm469, %v1349, 0
    %1369 = vmatprep.subr.bf16.mxu0 0
    %1370 = vmatpush1.bf16.msra.mxu0 %v1362
    %1371 = vmatprep.subr.bf16.mxu0 0
    %1372 = vmatpush1.bf16.msra.mxu0 %v1363
    %1373 = vmatprep.subr.bf16.mxu0 0
    %1374 = vmatpush1.bf16.msra.mxu0 0
    %1375 = vmatprep.subr.bf16.mxu0 0
    %1376 = vmatpush1.bf16.msra.mxu0 0
    %1377 = vmatprep.subr.bf16.mxu0 0
    %1378 = vmatpush1.bf16.msra.mxu0 0
    %1379 = vmatprep.subr.bf16.mxu0 0
    %1380 = vmatpush1.bf16.msra.mxu0 0
    %1381 = vmatprep.subr.bf16.mxu0 0
    %1382 = vmatpush1.bf16.msra.mxu0 0
    %1383 = vmatprep.subr.bf16.mxu0 0
    %1384 = vmatpush1.bf16.msra.mxu0 0
    %1385 = vmatprep.subr.bf16.mxu0 0
    %1386 = vmatpush1.bf16.msra.mxu0 0
    %1387 = vmatprep.subr.bf16.mxu0 0
    %1388 = vmatpush1.bf16.msra.mxu0 0
    %1389 = vmatprep.subr.bf16.mxu0 0
    %1390 = vmatpush1.bf16.msra.mxu0 0
    %1391 = vmatprep.subr.bf16.mxu0 0
    %1392 = vmatpush1.bf16.msra.mxu0 0
    %1393 = vmatprep.subr.bf16.mxu0 0
    %1394 = vmatpush1.bf16.msra.mxu0 0
    %1395 = vmatprep.subr.bf16.mxu0 0
    %1396 = vmatpush1.bf16.msra.mxu0 0
    %1397 = vmatprep.subr.bf16.mxu0 0
    %1398 = vmatpush1.bf16.msra.mxu0 0
    %1399 = vmatprep.subr.bf16.mxu0 0
    %1400 = vmatpush1.bf16.msra.mxu0 0
    %1401 = vmatprep.mubr.bf16.mxu0 0
    %1402 = vmatmul.mubr.bf16.gmra.mrb[0].mxu0 %v1367
    %v1403 = vpop.f32.mrb[0].mxu0
    %v1404 = vadd.f32 0.0, %v1403
    %v1405 = vpop.f32.mrb[0].mxu0
    %v1406 = vpop.f32.mrb[0].mxu0
    %v1407 = vpop.f32.mrb[0].mxu0
    %1408 = vdwg.mxu0
    %v1413 = vunpack.c.l.b16 %v1345
    %v1414 = vunpack.c.l.b16 %v1346
    %v1415 = vunpack.c.l.b16 %v1347
    %v1416 = vunpack.c.l.b16 %v1348
    %v1417 = vpack.c.b16 %v1414, %v1413
    %v1418 = vpack.c.b16 %v1416, %v1415
    %v1422 = vsel %vm469, %v1344, 0
    %1424 = vmatprep.subr.bf16.mxu0 0
    %1425 = vmatpush1.bf16.msra.mxu0 %v1417
    %1426 = vmatprep.subr.bf16.mxu0 0
    %1427 = vmatpush1.bf16.msra.mxu0 %v1418
    %1428 = vmatprep.subr.bf16.mxu0 0
    %1429 = vmatpush1.bf16.msra.mxu0 0
    %1430 = vmatprep.subr.bf16.mxu0 0
    %1431 = vmatpush1.bf16.msra.mxu0 0
    %1432 = vmatprep.subr.bf16.mxu0 0
    %1433 = vmatpush1.bf16.msra.mxu0 0
    %1434 = vmatprep.subr.bf16.mxu0 0
    %1435 = vmatpush1.bf16.msra.mxu0 0
    %1436 = vmatprep.subr.bf16.mxu0 0
    %1437 = vmatpush1.bf16.msra.mxu0 0
    %1438 = vmatprep.subr.bf16.mxu0 0
    %1439 = vmatpush1.bf16.msra.mxu0 0
    %1440 = vmatprep.subr.bf16.mxu0 0
    %1441 = vmatpush1.bf16.msra.mxu0 0
    %1442 = vmatprep.subr.bf16.mxu0 0
    %1443 = vmatpush1.bf16.msra.mxu0 0
    %1444 = vmatprep.subr.bf16.mxu0 0
    %1445 = vmatpush1.bf16.msra.mxu0 0
    %1446 = vmatprep.subr.bf16.mxu0 0
    %1447 = vmatpush1.bf16.msra.mxu0 0
    %1448 = vmatprep.subr.bf16.mxu0 0
    %1449 = vmatpush1.bf16.msra.mxu0 0
    %1450 = vmatprep.subr.bf16.mxu0 0
    %1451 = vmatpush1.bf16.msra.mxu0 0
    %1452 = vmatprep.subr.bf16.mxu0 0
    %1453 = vmatpush1.bf16.msra.mxu0 0
    %1454 = vmatprep.subr.bf16.mxu0 0
    %1455 = vmatpush1.bf16.msra.mxu0 0
    %1456 = vmatprep.mubr.bf16.mxu0 0
    %1457 = vmatmul.mubr.bf16.gmra.mrb[0].mxu0 %v1422
    %v1458 = vpop.f32.mrb[0].mxu0
    %v1459 = vadd.f32 %v1404, %v1458
    %v1460 = vpop.f32.mrb[0].mxu0
    %v1461 = vpop.f32.mrb[0].mxu0
    %v1462 = vpop.f32.mrb[0].mxu0
    %1463 = vdwg.mxu0
    %v1464 = vld [vmem:[#allocation20] sm:$0x1]
    %v1466 = vlaneseq
    %v1467 = vshrl.u32 %v1466, 7
    %v1468 = vsub.s32 0, %v1467
    %v1469 = vrot.slane %v1464, %v1468
    %v1471 = vadd.f32 %v1459, %v1469
    %v1472 = vmax.f32 %v1471, 0.0
    %v1473 = vpack.c.bf16 %v1472, %v1472
    %v1474 = vld [vmem:[#allocation21] sm:$0xf]
    %v1475 = vld [vmem:[#allocation21 + $0x4] sm:$0xf]
    %v1476 = vld [vmem:[#allocation21 + $0x8] sm:$0xf]
    %v1477 = vld [vmem:[#allocation21 + $0xc] sm:$0xf]
    %v1478 = vld [vmem:[#allocation23] sm:$0x1]
    %v1480 = vlaneseq
    %v1481 = vshrl.u32 %v1480, 7
    %v1482 = vsub.s32 0, %v1481
    %v1483 = vrot.slane %v1478, %v1482
    %v1489 = vunpack.c.l.b16 %v1474
    %v1490 = vunpack.c.l.b16 %v1475
    %v1491 = vunpack.c.l.b16 %v1476
    %v1492 = vunpack.c.l.b16 %v1477
    %v1493 = vpack.c.b16 %v1490, %v1489
    %v1494 = vpack.c.b16 %v1492, %v1491
    %v1498 = vsel %vm469, %v1473, 0
    %1500 = vmatprep.subr.bf16.mxu0 0
    %1501 = vmatpush1.bf16.msra.mxu0 %v1493
    %1502 = vmatprep.subr.bf16.mxu0 0
    %1503 = vmatpush1.bf16.msra.mxu0 %v1494
    %1504 = vmatprep.subr.bf16.mxu0 0
    %1505 = vmatpush1.bf16.msra.mxu0 0
    %1506 = vmatprep.subr.bf16.mxu0 0
    %1507 = vmatpush1.bf16.msra.mxu0 0
    %1508 = vmatprep.subr.bf16.mxu0 0
    %1509 = vmatpush1.bf16.msra.mxu0 0
    %1510 = vmatprep.subr.bf16.mxu0 0
    %1511 = vmatpush1.bf16.msra.mxu0 0
    %1512 = vmatprep.subr.bf16.mxu0 0
    %1513 = vmatpush1.bf16.msra.mxu0 0
    %1514 = vmatprep.subr.bf16.mxu0 0
    %1515 = vmatpush1.bf16.msra.mxu0 0
    %1516 = vmatprep.subr.bf16.mxu0 0
    %1517 = vmatpush1.bf16.msra.mxu0 0
    %1518 = vmatprep.subr.bf16.mxu0 0
    %1519 = vmatpush1.bf16.msra.mxu0 0
    %1520 = vmatprep.subr.bf16.mxu0 0
    %1521 = vmatpush1.bf16.msra.mxu0 0
    %1522 = vmatprep.subr.bf16.mxu0 0
    %1523 = vmatpush1.bf16.msra.mxu0 0
    %1524 = vmatprep.subr.bf16.mxu0 0
    %1525 = vmatpush1.bf16.msra.mxu0 0
    %1526 = vmatprep.subr.bf16.mxu0 0
    %1527 = vmatpush1.bf16.msra.mxu0 0
    %1528 = vmatprep.subr.bf16.mxu0 0
    %1529 = vmatpush1.bf16.msra.mxu0 0
    %1530 = vmatprep.subr.bf16.mxu0 0
    %1531 = vmatpush1.bf16.msra.mxu0 0
    %1532 = vmatprep.mubr.bf16.mxu0 0
    %1533 = vmatmul.mubr.bf16.gmra.mrb[0].mxu0 %v1498
    %v1534 = vpop.f32.mrb[0].mxu0
    %v1535 = vadd.f32 %v1483, %v1534
    %v1536 = vpop.f32.mrb[0].mxu0
    %v1537 = vpop.f32.mrb[0].mxu0
    %v1538 = vpop.f32.mrb[0].mxu0
    %1539 = vdwg.mxu0
    %v1540 = vmax.f32 %v1535, 0.0
    %v1541 = vpack.c.bf16 %v1540, %v1540
    %v1542 = vld [vmem:[%s26] sm:$0xf]
    %v1543 = vld [vmem:[%s26 + $0x4] sm:$0xf]
    %v1544 = vld [vmem:[%s26 + $0x8] sm:$0xf]
    %v1545 = vld [vmem:[%s26 + $0xc] sm:$0xf]
    %v1546 = vld [vmem:[%s27] sm:$0x1]
    %v1548 = vlaneseq
    %v1549 = vshrl.u32 %v1548, 7
    %v1550 = vsub.s32 0, %v1549
    %v1551 = vrot.slane %v1546, %v1550
    %v1557 = vunpack.c.l.b16 %v1542
    %v1558 = vunpack.c.l.b16 %v1543
    %v1559 = vunpack.c.l.b16 %v1544
    %v1560 = vunpack.c.l.b16 %v1545
    %v1561 = vpack.c.b16 %v1558, %v1557
    %v1562 = vpack.c.b16 %v1560, %v1559
    %v1566 = vsel %vm469, %v1541, 0
    %1568 = vmatprep.subr.bf16.mxu0 0
    %1569 = vmatpush1.bf16.msra.mxu0 %v1561
    %1570 = vmatprep.subr.bf16.mxu0 0
    %1571 = vmatpush1.bf16.msra.mxu0 %v1562
    %1572 = vmatprep.subr.bf16.mxu0 0
    %1573 = vmatpush1.bf16.msra.mxu0 0
    %1574 = vmatprep.subr.bf16.mxu0 0
    %1575 = vmatpush1.bf16.msra.mxu0 0
    %1576 = vmatprep.subr.bf16.mxu0 0
    %1577 = vmatpush1.bf16.msra.mxu0 0
    %1578 = vmatprep.subr.bf16.mxu0 0
    %1579 = vmatpush1.bf16.msra.mxu0 0
    %1580 = vmatprep.subr.bf16.mxu0 0
    %1581 = vmatpush1.bf16.msra.mxu0 0
    %1582 = vmatprep.subr.bf16.mxu0 0
    %1583 = vmatpush1.bf16.msra.mxu0 0
    %1584 = vmatprep.subr.bf16.mxu0 0
    %1585 = vmatpush1.bf16.msra.mxu0 0
    %1586 = vmatprep.subr.bf16.mxu0 0
    %1587 = vmatpush1.bf16.msra.mxu0 0
    %1588 = vmatprep.subr.bf16.mxu0 0
    %1589 = vmatpush1.bf16.msra.mxu0 0
    %1590 = vmatprep.subr.bf16.mxu0 0
    %1591 = vmatpush1.bf16.msra.mxu0 0
    %1592 = vmatprep.subr.bf16.mxu0 0
    %1593 = vmatpush1.bf16.msra.mxu0 0
    %1594 = vmatprep.subr.bf16.mxu0 0
    %1595 = vmatpush1.bf16.msra.mxu0 0
    %1596 = vmatprep.subr.bf16.mxu0 0
    %1597 = vmatpush1.bf16.msra.mxu0 0
    %1598 = vmatprep.subr.bf16.mxu0 0
    %1599 = vmatpush1.bf16.msra.mxu0 0
    %1600 = vmatprep.mubr.bf16.mxu0 0
    %1601 = vmatmul.mubr.bf16.gmra.mrb[0].mxu0 %v1566
    %v1602 = vpop.f32.mrb[0].mxu0
    %v1603 = vadd.f32 %v1551, %v1602
    %v1604 = vpop.f32.mrb[0].mxu0
    %v1605 = vpop.f32.mrb[0].mxu0
    %v1606 = vpop.f32.mrb[0].mxu0
    %1607 = vdwg.mxu0
    %v1608 = vmax.f32 %v1603, 0.0
    %vm1609 = vcmask 254976
    %1610 = vst.msk [vmem:[#allocation24] sm:$0x3] %vm1609, %v1608
    // Predicated region
    $region166: #{tpu_custom_call.1} parent=1 // pred_check
      _
    $region167: #{tpu_custom_call.1} parent=1 // pred_check_branch
      %1612 = sbr.rel (0) target = $region169
    $region168: #{tpu_custom_call.1} parent=1 // pred_region
      %s1614 = ssub.s32 32, 32
      %1615 = vsyncadd [#allocation5], %s1614
      %s1617 = sshll.u32 [#allocation24], 4
      %s1618 = int_to_ptr.vmem [resolvable:$true] %s1617
      %1620 = dma.vmem_to_hbm [thread:$0]  %s1618, 32, %s28, [#allocation5]
    $region169: #{tpu_custom_call.1} parent=1 // pred_fallthru
      _
    // Predicated region
    $region170: #{tpu_custom_call.1} parent=1 // pred_check
      _
    $region171: #{tpu_custom_call.1} parent=1 // pred_check_branch
      %1622 = sbr.rel (0) target = $region173
    $region172: #{tpu_custom_call.1} parent=1 // pred_region
      %1623 = dma.done [#allocation5], 32
    $region173: #{tpu_custom_call.1} parent=1 // pred_fallthru
      _
    %1624 = vsyncpa [#allocation4], 1
    %1625 = vsyncpa [#allocation7], 1
    %1626 = vsyncpa [#allocation10], 1
    %1627 = vsyncpa [#allocation13], 1
    %1628 = vsyncpa [#allocation16], 1
    %1629 = vsyncpa [#allocation19], 1
    %1630 = vsyncpa [#allocation22], 1
    %1631 = vsyncpa [#allocation5], 1

</llo_original>
